<compile_context>
chip_gen: v7x
topology: tpu7x:2x2x1
jax: 0.10.0
libtpu: 0.0.40
codegen_flags: <defaults>
</compile_context>

<pallas_src>
import jax
import jax.numpy as jnp
from jax.experimental import pallas as pl
from jax.experimental.pallas import tpu as pltpu

STATE_DIM = 3
ACTION_DIM = 3
MAX_ACTION = 20.0

HIDDEN = (512, 512, 256, 128)

LANE = 128
SUBLANE_TILE = 16          # row granularity (bf16-safe: 16 packed sublanes)

IN_PAD = LANE              # K of the first matmul (x zero-extended 3 -> 128 in VMEM)
OUT_PAD = LANE             # action_dim 3 -> 128 lanes (lane-dense unmasked stores)

TILE_B_MAX = 1024          # max batch rows per grid step (review: raised from 256)
MIN_SPLIT_ROWS = 256       # min rows per tile before forcing >= 2 tiles (v7x 2 TCs)


def _round_up(x, m):
    return ((x + m - 1) // m) * m


def _actor_kernel(x_ref,
                  w1_ref, b1_ref,
                  w2_ref, b2_ref,
                  w3_ref, b3_ref,
                  w4_ref, b4_ref,
                  w5_ref, b5_ref,
                  o_ref,
                  xpad_ref):
    """Full Actor forward for one batch tile; all weights VMEM-resident.

    x arrives unpadded as a (tile_b, 3) f32 block and is zero-extended into a
    (tile_b, 128) bf16 VMEM scratch tile so the first matmul has a clean,
    MXU-friendly K.  Matmuls run in bf16 with f32 accumulation; bias add, ReLU
    and tanh stay in f32.
    """
    # Zero the K-pad scratch every step (cheap), then write the 3 real lanes.
    # Deliberately NOT a program_id==0 init: with the "parallel" batch axis
    # split across v7x's two TensorCores, step 0 runs on only one core.
    xpad_ref[...] = jnp.zeros_like(xpad_ref)
    xpad_ref[:, :STATE_DIM] = x_ref[...].astype(jnp.bfloat16)

    h = jnp.dot(xpad_ref[...], w1_ref[...],
                preferred_element_type=jnp.float32) + b1_ref[...]
    h = jnp.maximum(h, 0.0).astype(jnp.bfloat16)

    h = jnp.dot(h, w2_ref[...], preferred_element_type=jnp.float32) + b2_ref[...]
    h = jnp.maximum(h, 0.0).astype(jnp.bfloat16)

    h = jnp.dot(h, w3_ref[...], preferred_element_type=jnp.float32) + b3_ref[...]
    h = jnp.maximum(h, 0.0).astype(jnp.bfloat16)

    h = jnp.dot(h, w4_ref[...], preferred_element_type=jnp.float32) + b4_ref[...]
    h = jnp.maximum(h, 0.0).astype(jnp.bfloat16)

    h = jnp.dot(h, w5_ref[...], preferred_element_type=jnp.float32) + b5_ref[...]
    o_ref[...] = MAX_ACTION * jnp.tanh(h)


def init_actor_params(key):
    """PyTorch-style uniform(+/- 1/sqrt(fan_in)) init.

    Weights are returned as (in_features, out_features) so the kernel computes
    y = x @ W + b (PyTorch stores (out, in); the transpose is a setup-time
    layout choice, not a semantic change).
    """
    dims = (STATE_DIM,) + HIDDEN + (ACTION_DIM,)
    params = []
    for i in range(len(dims) - 1):
        fan_in, fan_out = dims[i], dims[i + 1]
        key, kw, kb = jax.random.split(key, 3)
        bound = 1.0 / jnp.sqrt(jnp.float32(fan_in))
        w = jax.random.uniform(kw, (fan_in, fan_out), jnp.float32, -bound, bound)
        b = jax.random.uniform(kb, (fan_out,), jnp.float32, -bound, bound)
        params.append((w, b))
    return tuple(params)


def prepare_params(params):
    """One-time parameter prep (hoisted out of the per-call path):

    * pad W1 rows 3 -> 128 (so the in-kernel K-pad of x hits zero weights),
    * pad W5 cols / b5 3 -> 128 with zeros,
    * cast all weights to bf16,
    * reshape biases to (1, N) f32.
    """
    (w1, b1), (w2, b2), (w3, b3), (w4, b4), (w5, b5) = params

    w1_p = jnp.zeros((IN_PAD, HIDDEN[0]), jnp.float32).at[:STATE_DIM, :].set(w1)
    w5_p = jnp.zeros((HIDDEN[3], OUT_PAD), jnp.float32).at[:, :ACTION_DIM].set(w5)
    b5_p = jnp.zeros((1, OUT_PAD), jnp.float32).at[:, :ACTION_DIM].set(b5)

    return (
        w1_p.astype(jnp.bfloat16), b1.reshape(1, -1).astype(jnp.float32),
        w2.astype(jnp.bfloat16),   b2.reshape(1, -1).astype(jnp.float32),
        w3.astype(jnp.bfloat16),   b3.reshape(1, -1).astype(jnp.float32),
        w4.astype(jnp.bfloat16),   b4.reshape(1, -1).astype(jnp.float32),
        w5_p.astype(jnp.bfloat16), b5_p,
    )


@jax.jit
def actor_forward(x, prepared):
    """x: (batch, STATE_DIM) float32 -> (batch, ACTION_DIM) float32."""
    (w1, b1, w2, b2, w3, b3, w4, b4, w5, b5) = prepared
    batch = x.shape[0]

    # Batch-tile selection (all trace-time integers):
    #  * up to TILE_B_MAX rows per grid step,
    #  * an even count of >= 2 steps once there is enough work, so v7x's two
    #    TensorCores both engage via the "parallel" axis,
    #  * 16-row granularity (bf16 sublane packing of the in-kernel scratch).
    b_rounded = _round_up(max(batch, 1), SUBLANE_TILE)
    n_tiles = pl.cdiv(b_rounded, TILE_B_MAX)
    if b_rounded >= 2 * MIN_SPLIT_ROWS:
        n_tiles = max(n_tiles, 2)
        n_tiles += n_tiles % 2
    tile_b = _round_up(pl.cdiv(b_rounded, n_tiles), SUBLANE_TILE)
    b_pad = tile_b * n_tiles

    # Only per-call data prep: row-pad x to b_pad. The 3 -> 128 feature pad now
    # happens in VMEM inside the kernel (no inflated HBM copy of x).
    x_p = x.astype(jnp.float32)
    if b_pad != batch:
        x_p = jnp.pad(x_p, ((0, b_pad - batch), (0, 0)))

    def const_spec(shape):
        # Weights/biases: one full block, same block index for every batch tile
        # -> fetched once, VMEM-resident across the grid.
        return pl.BlockSpec(shape, lambda i: (0, 0))

    weight_ops = (w1, b1, w2, b2, w3, b3, w4, b4, w5, b5)
    in_specs = [pl.BlockSpec((tile_b, STATE_DIM), lambda i: (i, 0))]
    in_specs += [const_spec(op.shape) for op in weight_ops]

    out = pl.pallas_call(
        _actor_kernel,
        out_shape=jax.ShapeDtypeStruct((b_pad, OUT_PAD), jnp.float32),
        grid_spec=pltpu.PrefetchScalarGridSpec(
            num_scalar_prefetch=0,
            grid=(n_tiles,),
            in_specs=in_specs,
            out_specs=pl.BlockSpec((tile_b, OUT_PAD), lambda i: (i, 0)),
            scratch_shapes=[pltpu.VMEM((tile_b, IN_PAD), jnp.bfloat16)],
        ),
        compiler_params=pltpu.CompilerParams(
            dimension_semantics=("parallel",),
        ),
    )(x_p, *weight_ops)

    return out[:batch, :ACTION_DIM]


def actor_reference(x, params):
    """Plain-JAX reference mirroring the kernel's bf16 weight/activation rounding."""
    h = x.astype(jnp.float32)
    for i, (w, b) in enumerate(params):
        h_b = h.astype(jnp.bfloat16).astype(jnp.float32)
        w_b = w.astype(jnp.bfloat16).astype(jnp.float32)
        h = h_b @ w_b + b
        if i < len(params) - 1:
            h = jnp.maximum(h, 0.0)
    return MAX_ACTION * jnp.tanh(h)


if __name__ == "__main__":
    key = jax.random.PRNGKey(0)
    pkey, xkey, xkey2 = jax.random.split(key, 3)

    params = init_actor_params(pkey)
    prepared = prepare_params(params)   # one-time setup, not per call

    # Small-shape check (single grid step).
    batch = 2
    x = jax.random.normal(xkey, (batch, STATE_DIM), jnp.float32)
    out = jax.block_until_ready(actor_forward(x, prepared))
    ref = actor_reference(x, params)
    assert out.shape == (batch, ACTION_DIM), out.shape
    assert jnp.allclose(out, ref, atol=2e-3, rtol=2e-3), (out, ref)

    # Multi-tile check (exercises the parallel grid axis and row padding).
    batch_big = 700
    x_big = jax.random.normal(xkey2, (batch_big, STATE_DIM), jnp.float32)
    out_big = jax.block_until_ready(actor_forward(x_big, prepared))
    ref_big = actor_reference(x_big, params)
    assert out_big.shape == (batch_big, ACTION_DIM), out_big.shape
    assert jnp.allclose(out_big, ref_big, atol=2e-2, rtol=2e-2)

    print("KERNEL_OK")
</pallas_src>

<mosaic_0001>
module attributes {stable_mosaic.version = 11 : i64} {
  func.func @_actor_kernel(%arg0: i32, %arg1: memref<16x3xf32, #tpu.memory_space<vmem>>, %arg2: memref<128x512xbf16, #tpu.memory_space<vmem>>, %arg3: memref<1x512xf32, #tpu.memory_space<vmem>>, %arg4: memref<512x512xbf16, #tpu.memory_space<vmem>>, %arg5: memref<1x512xf32, #tpu.memory_space<vmem>>, %arg6: memref<512x256xbf16, #tpu.memory_space<vmem>>, %arg7: memref<1x256xf32, #tpu.memory_space<vmem>>, %arg8: memref<256x128xbf16, #tpu.memory_space<vmem>>, %arg9: memref<1x128xf32, #tpu.memory_space<vmem>>, %arg10: memref<128x128xbf16, #tpu.memory_space<vmem>>, %arg11: memref<1x128xf32, #tpu.memory_space<vmem>>, %arg12: memref<16x128xf32, #tpu.memory_space<vmem>>, %arg13: memref<16x128xbf16, #tpu.memory_space<vmem>>) attributes {dimension_semantics = [#tpu.dimension_semantics<parallel>], iteration_bounds = array<i64: 1>, scalar_prefetch = 0 : i64, scratch_operands = 1 : i64, tpu.core_type = #tpu.core_type<tc>, window_params = [{transform_indices = @transform_0, window_bounds = array<i64: 16, 3>}, {pipeline_mode = #tpu.pipeline_mode<synchronous>, transform_indices = @transform_1, window_bounds = array<i64: 128, 512>}, {pipeline_mode = #tpu.pipeline_mode<synchronous>, transform_indices = @transform_2, window_bounds = array<i64: 1, 512>}, {pipeline_mode = #tpu.pipeline_mode<synchronous>, transform_indices = @transform_3, window_bounds = array<i64: 512, 512>}, {pipeline_mode = #tpu.pipeline_mode<synchronous>, transform_indices = @transform_4, window_bounds = array<i64: 1, 512>}, {pipeline_mode = #tpu.pipeline_mode<synchronous>, transform_indices = @transform_5, window_bounds = array<i64: 512, 256>}, {pipeline_mode = #tpu.pipeline_mode<synchronous>, transform_indices = @transform_6, window_bounds = array<i64: 1, 256>}, {pipeline_mode = #tpu.pipeline_mode<synchronous>, transform_indices = @transform_7, window_bounds = array<i64: 256, 128>}, {pipeline_mode = #tpu.pipeline_mode<synchronous>, transform_indices = @transform_8, window_bounds = array<i64: 1, 128>}, {pipeline_mode = #tpu.pipeline_mode<synchronous>, transform_indices = @transform_9, window_bounds = array<i64: 128, 128>}, {pipeline_mode = #tpu.pipeline_mode<synchronous>, transform_indices = @transform_10, window_bounds = array<i64: 1, 128>}, {transform_indices = @transform_11, window_bounds = array<i64: 16, 128>}]} {
    %cst = arith.constant 0.000000e+00 : bf16
    %0 = vector.broadcast %cst : bf16 to vector<16x128xbf16>
    %c0 = arith.constant 0 : index
    %c0_0 = arith.constant 0 : index
    %1 = vector.load %arg13[%c0, %c0_0] : memref<16x128xbf16, #tpu.memory_space<vmem>>, vector<16x128xbf16>
    tpu.vector_store %arg13[%c0, %c0_0], %0 {strides = array<i32>} : memref<16x128xbf16, #tpu.memory_space<vmem>>, vector<16x128xbf16>,
    %c0_1 = arith.constant 0 : index
    %c0_2 = arith.constant 0 : index
    %2 = vector.load %arg1[%c0_1, %c0_2] : memref<16x3xf32, #tpu.memory_space<vmem>>, vector<16x3xf32>
    %3 = arith.truncf %2 : vector<16x3xf32> to vector<16x3xbf16>
    %c0_3 = arith.constant 0 : index
    %c0_4 = arith.constant 0 : index
    %4 = vector.load %arg13[%c0_3, %c0_4] : memref<16x128xbf16, #tpu.memory_space<vmem>>, vector<16x3xbf16>
    tpu.vector_store %arg13[%c0_3, %c0_4], %3 {strides = array<i32>} : memref<16x128xbf16, #tpu.memory_space<vmem>>, vector<16x3xbf16>,
    %c0_5 = arith.constant 0 : index
    %c0_6 = arith.constant 0 : index
    %5 = vector.load %arg13[%c0_5, %c0_6] : memref<16x128xbf16, #tpu.memory_space<vmem>>, vector<16x128xbf16>
    %c0_7 = arith.constant 0 : index
    %c0_8 = arith.constant 0 : index
    %6 = vector.load %arg2[%c0_7, %c0_8] : memref<128x512xbf16, #tpu.memory_space<vmem>>, vector<128x512xbf16>
    %cst_9 = arith.constant dense<0.000000e+00> : vector<16x512xf32>
    %7 = tpu.matmul %5, %6, %cst_9 {dimension_numbers = #tpu.dot_dimension_numbers<[1], [0], [0], [1], [0, 0, 1, 1], [], []>} : vector<16x128xbf16>, vector<128x512xbf16>, vector<16x512xf32> -> vector<16x512xf32>
    %c0_10 = arith.constant 0 : index
    %c0_11 = arith.constant 0 : index
    %8 = vector.load %arg3[%c0_10, %c0_11] : memref<1x512xf32, #tpu.memory_space<vmem>>, vector<1x512xf32>
    %9 = vector.broadcast %8 : vector<1x512xf32> to vector<16x512xf32>
    %10 = arith.addf %7, %9 : vector<16x512xf32>
    %cst_12 = arith.constant 0.000000e+00 : f32
    %11 = vector.broadcast %cst_12 : f32 to vector<16x512xf32>
    %12 = arith.maximumf %10, %11 : vector<16x512xf32>
    %13 = arith.truncf %12 : vector<16x512xf32> to vector<16x512xbf16>
    %c0_13 = arith.constant 0 : index
    %c0_14 = arith.constant 0 : index
    %14 = vector.load %arg4[%c0_13, %c0_14] : memref<512x512xbf16, #tpu.memory_space<vmem>>, vector<512x512xbf16>
    %cst_15 = arith.constant dense<0.000000e+00> : vector<16x512xf32>
    %15 = tpu.matmul %13, %14, %cst_15 {dimension_numbers = #tpu.dot_dimension_numbers<[1], [0], [0], [1], [0, 0, 1, 1], [], []>} : vector<16x512xbf16>, vector<512x512xbf16>, vector<16x512xf32> -> vector<16x512xf32>
    %c0_16 = arith.constant 0 : index
    %c0_17 = arith.constant 0 : index
    %16 = vector.load %arg5[%c0_16, %c0_17] : memref<1x512xf32, #tpu.memory_space<vmem>>, vector<1x512xf32>
    %17 = vector.broadcast %16 : vector<1x512xf32> to vector<16x512xf32>
    %18 = arith.addf %15, %17 : vector<16x512xf32>
    %cst_18 = arith.constant 0.000000e+00 : f32
    %19 = vector.broadcast %cst_18 : f32 to vector<16x512xf32>
    %20 = arith.maximumf %18, %19 : vector<16x512xf32>
    %21 = arith.truncf %20 : vector<16x512xf32> to vector<16x512xbf16>
    %c0_19 = arith.constant 0 : index
    %c0_20 = arith.constant 0 : index
    %22 = vector.load %arg6[%c0_19, %c0_20] : memref<512x256xbf16, #tpu.memory_space<vmem>>, vector<512x256xbf16>
    %cst_21 = arith.constant dense<0.000000e+00> : vector<16x256xf32>
    %23 = tpu.matmul %21, %22, %cst_21 {dimension_numbers = #tpu.dot_dimension_numbers<[1], [0], [0], [1], [0, 0, 1, 1], [], []>} : vector<16x512xbf16>, vector<512x256xbf16>, vector<16x256xf32> -> vector<16x256xf32>
    %c0_22 = arith.constant 0 : index
    %c0_23 = arith.constant 0 : index
    %24 = vector.load %arg7[%c0_22, %c0_23] : memref<1x256xf32, #tpu.memory_space<vmem>>, vector<1x256xf32>
    %25 = vector.broadcast %24 : vector<1x256xf32> to vector<16x256xf32>
    %26 = arith.addf %23, %25 : vector<16x256xf32>
    %cst_24 = arith.constant 0.000000e+00 : f32
    %27 = vector.broadcast %cst_24 : f32 to vector<16x256xf32>
    %28 = arith.maximumf %26, %27 : vector<16x256xf32>
    %29 = arith.truncf %28 : vector<16x256xf32> to vector<16x256xbf16>
    %c0_25 = arith.constant 0 : index
    %c0_26 = arith.constant 0 : index
    %30 = vector.load %arg8[%c0_25, %c0_26] : memref<256x128xbf16, #tpu.memory_space<vmem>>, vector<256x128xbf16>
    %cst_27 = arith.constant dense<0.000000e+00> : vector<16x128xf32>
    %31 = tpu.matmul %29, %30, %cst_27 {dimension_numbers = #tpu.dot_dimension_numbers<[1], [0], [0], [1], [0, 0, 1, 1], [], []>} : vector<16x256xbf16>, vector<256x128xbf16>, vector<16x128xf32> -> vector<16x128xf32>
    %c0_28 = arith.constant 0 : index
    %c0_29 = arith.constant 0 : index
    %32 = vector.load %arg9[%c0_28, %c0_29] : memref<1x128xf32, #tpu.memory_space<vmem>>, vector<1x128xf32>
    %33 = vector.broadcast %32 : vector<1x128xf32> to vector<16x128xf32>
    %34 = arith.addf %31, %33 : vector<16x128xf32>
    %cst_30 = arith.constant 0.000000e+00 : f32
    %35 = vector.broadcast %cst_30 : f32 to vector<16x128xf32>
    %36 = arith.maximumf %34, %35 : vector<16x128xf32>
    %37 = arith.truncf %36 : vector<16x128xf32> to vector<16x128xbf16>
    %c0_31 = arith.constant 0 : index
    %c0_32 = arith.constant 0 : index
    %38 = vector.load %arg10[%c0_31, %c0_32] : memref<128x128xbf16, #tpu.memory_space<vmem>>, vector<128x128xbf16>
    %cst_33 = arith.constant dense<0.000000e+00> : vector<16x128xf32>
    %39 = tpu.matmul %37, %38, %cst_33 {dimension_numbers = #tpu.dot_dimension_numbers<[1], [0], [0], [1], [0, 0, 1, 1], [], []>} : vector<16x128xbf16>, vector<128x128xbf16>, vector<16x128xf32> -> vector<16x128xf32>
    %c0_34 = arith.constant 0 : index
    %c0_35 = arith.constant 0 : index
    %40 = vector.load %arg11[%c0_34, %c0_35] : memref<1x128xf32, #tpu.memory_space<vmem>>, vector<1x128xf32>
    %41 = vector.broadcast %40 : vector<1x128xf32> to vector<16x128xf32>
    %42 = arith.addf %39, %41 : vector<16x128xf32>
    %43 = math.tanh %42 : vector<16x128xf32>
    %cst_36 = arith.constant 2.000000e+01 : f32
    %44 = vector.broadcast %cst_36 : f32 to vector<16x128xf32>
    %45 = arith.mulf %44, %43 : vector<16x128xf32>
    %c0_37 = arith.constant 0 : index
    %c0_38 = arith.constant 0 : index
    %46 = vector.load %arg12[%c0_37, %c0_38] : memref<16x128xf32, #tpu.memory_space<vmem>>, vector<16x128xf32>
    tpu.vector_store %arg12[%c0_37, %c0_38], %45 {strides = array<i32>} : memref<16x128xf32, #tpu.memory_space<vmem>>, vector<16x128xf32>,
    return
  }
  func.func @transform_0(%arg0: i32) -> (i32, i32) {
    %c0_i32 = arith.constant 0 : i32
    %c0_i32_0 = arith.constant 0 : i32
    return %arg0, %c0_i32 : i32, i32
  }
  func.func @transform_1(%arg0: i32) -> (i32, i32) {
    %c0_i32 = arith.constant 0 : i32
    %c0_i32_0 = arith.constant 0 : i32
    %c0_i32_1 = arith.constant 0 : i32
    return %c0_i32, %c0_i32_0 : i32, i32
  }
  func.func @transform_2(%arg0: i32) -> (i32, i32) {
    %c0_i32 = arith.constant 0 : i32
    %c0_i32_0 = arith.constant 0 : i32
    %c0_i32_1 = arith.constant 0 : i32
    return %c0_i32, %c0_i32_0 : i32, i32
  }
  func.func @transform_3(%arg0: i32) -> (i32, i32) {
    %c0_i32 = arith.constant 0 : i32
    %c0_i32_0 = arith.constant 0 : i32
    %c0_i32_1 = arith.constant 0 : i32
    return %c0_i32, %c0_i32_0 : i32, i32
  }
  func.func @transform_4(%arg0: i32) -> (i32, i32) {
    %c0_i32 = arith.constant 0 : i32
    %c0_i32_0 = arith.constant 0 : i32
    %c0_i32_1 = arith.constant 0 : i32
    return %c0_i32, %c0_i32_0 : i32, i32
  }
  func.func @transform_5(%arg0: i32) -> (i32, i32) {
    %c0_i32 = arith.constant 0 : i32
    %c0_i32_0 = arith.constant 0 : i32
    %c0_i32_1 = arith.constant 0 : i32
    return %c0_i32, %c0_i32_0 : i32, i32
  }
  func.func @transform_6(%arg0: i32) -> (i32, i32) {
    %c0_i32 = arith.constant 0 : i32
    %c0_i32_0 = arith.constant 0 : i32
    %c0_i32_1 = arith.constant 0 : i32
    return %c0_i32, %c0_i32_0 : i32, i32
  }
  func.func @transform_7(%arg0: i32) -> (i32, i32) {
    %c0_i32 = arith.constant 0 : i32
    %c0_i32_0 = arith.constant 0 : i32
    %c0_i32_1 = arith.constant 0 : i32
    return %c0_i32, %c0_i32_0 : i32, i32
  }
  func.func @transform_8(%arg0: i32) -> (i32, i32) {
    %c0_i32 = arith.constant 0 : i32
    %c0_i32_0 = arith.constant 0 : i32
    %c0_i32_1 = arith.constant 0 : i32
    return %c0_i32, %c0_i32_0 : i32, i32
  }
  func.func @transform_9(%arg0: i32) -> (i32, i32) {
    %c0_i32 = arith.constant 0 : i32
    %c0_i32_0 = arith.constant 0 : i32
    %c0_i32_1 = arith.constant 0 : i32
    return %c0_i32, %c0_i32_0 : i32, i32
  }
  func.func @transform_10(%arg0: i32) -> (i32, i32) {
    %c0_i32 = arith.constant 0 : i32
    %c0_i32_0 = arith.constant 0 : i32
    %c0_i32_1 = arith.constant 0 : i32
    return %c0_i32, %c0_i32_0 : i32, i32
  }
  func.func @transform_11(%arg0: i32) -> (i32, i32) {
    %c0_i32 = arith.constant 0 : i32
    %c0_i32_0 = arith.constant 0 : i32
    return %arg0, %c0_i32 : i32, i32
  }
}

</mosaic_0001>

<llo_original>
// kernel: actor_forward.1
$region0: #{actor_forward.1}
  #allocation0 [shape = 'u32[]', space=smem, size = 0x4, offset = 0x4, fixed_abs, tag = 'smem constant byte address 0x4 - core index']
  #allocation1 [shape = 'u32[144,128]{1,0:T(1,128)}', space=vmem, size = 0x12000, scoped, tag = 'internal scratch']
  #allocation2 [shape = 'bf16[16,128]{1,0:T(16,128)(2,1)}', space=vmem, size = 0x1000, scoped, tag = 'scratch operand']
  %s0 = inlined_call_operand.vmem [shape: f32[16,3], index: 0, kind: input, shape index: {}]
  %s1 = inlined_call_operand.hbm [shape: bf16[128,512], index: 1, kind: input, shape index: {}]
  %s2 = inlined_call_operand.vmem [shape: f32[1,512], index: 2, kind: input, shape index: {}]
  %s3 = inlined_call_operand.hbm [shape: bf16[512,512], index: 3, kind: input, shape index: {}]
  %s4 = inlined_call_operand.vmem [shape: f32[1,512], index: 4, kind: input, shape index: {}]
  %s5 = inlined_call_operand.hbm [shape: bf16[512,256], index: 5, kind: input, shape index: {}]
  %s6 = inlined_call_operand.vmem [shape: f32[1,256], index: 6, kind: input, shape index: {}]
  %s7 = inlined_call_operand.hbm [shape: bf16[256,128], index: 7, kind: input, shape index: {}]
  %s8 = inlined_call_operand.vmem [shape: f32[1,128], index: 8, kind: input, shape index: {}]
  %s9 = inlined_call_operand.hbm [shape: bf16[128,128], index: 9, kind: input, shape index: {}]
  %s10 = inlined_call_operand.vmem [shape: f32[1,128], index: 10, kind: input, shape index: {}]
  %s11 = inlined_call_operand.vmem [shape: f32[16,128], index: 11, kind: output, shape index: {}]
  %s12 = sld [smem:[#allocation0]]
  $region74: #{actor_forward.1} parent=0
    _
  %s14 = ssub.s32 1, %s12
  %s15 = scalar_select 0, %s14, %s12
  $region1: #{actor_forward.1} parent=0
    #allocation3 [shape = 'u8[131072]{0}', space=vmem, size = 0x20000, scoped, tag = 'input window, operand 1, single buffered']
    #allocation4 [shape = 's32[1]{0}', space=sflag, size = 0x4, scoped, tag = 'scoped memory for actor_forward.1']
    #allocation5 [shape = 'u8[524288]{0}', space=vmem, size = 0x80000, scoped, tag = 'input window, operand 3, single buffered']
    #allocation6 [shape = 's32[1]{0}', space=sflag, size = 0x4, scoped, tag = 'scoped memory for actor_forward.1']
    #allocation7 [shape = 'u8[262144]{0}', space=vmem, size = 0x40000, scoped, tag = 'input window, operand 5, single buffered']
    #allocation8 [shape = 'u8[65536]{0}', space=vmem, size = 0x10000, scoped, tag = 'input window, operand 7, single buffered']
    #allocation9 [shape = 's32[1]{0}', space=sflag, size = 0x4, scoped, tag = 'scoped memory for actor_forward.1']
    #allocation10 [shape = 'u8[32768]{0}', space=vmem, size = 0x8000, scoped, tag = 'input window, operand 9, single buffered']
    %16 = vsyncpa [#allocation4], 0
    %17 = vsyncpa [#allocation6], 0
    %18 = vsyncpa [#allocation9], 0
    // Predicated region
    $region2: #{actor_forward.1} parent=1 // pred_check
      _
    $region3: #{actor_forward.1} parent=1 // pred_check_branch
      %20 = sbr.rel (0) target = $region5
    $region4: #{actor_forward.1} parent=1 // pred_region
      _
    $region5: #{actor_forward.1} parent=1 // pred_fallthru
      _
    // Predicated region
    $region6: #{actor_forward.1} parent=1 // pred_check
      _
    $region7: #{actor_forward.1} parent=1 // pred_check_branch
      %22 = sbr.rel (0) target = $region9
    $region8: #{actor_forward.1} parent=1 // pred_region
      %s24 = ssub.s32 4096, 4096
      %25 = vsyncadd [#allocation4], %s24
      %s26 = sshll.u32 [#allocation3], 4
      %s27 = int_to_ptr.vmem [resolvable:$true] %s26
      %32 = dma.hbm_to_vmem [thread:$0]  %s1, 4096, %s27, [#allocation4], 256, 256, 16
    $region9: #{actor_forward.1} parent=1 // pred_fallthru
      _
    // Predicated region
    $region10: #{actor_forward.1} parent=1 // pred_check
      _
    $region11: #{actor_forward.1} parent=1 // pred_check_branch
      %34 = sbr.rel (0) target = $region13
    $region12: #{actor_forward.1} parent=1 // pred_region
      _
    $region13: #{actor_forward.1} parent=1 // pred_fallthru
      _
    // Predicated region
    $region14: #{actor_forward.1} parent=1 // pred_check
      _
    $region15: #{actor_forward.1} parent=1 // pred_check_branch
      %36 = sbr.rel (0) target = $region17
    $region16: #{actor_forward.1} parent=1 // pred_region
      %s38 = ssub.s32 16384, 16384
      %39 = vsyncadd [#allocation6], %s38
      %s40 = sshll.u32 [#allocation5], 4
      %s41 = int_to_ptr.vmem [resolvable:$true] %s40
      %46 = dma.hbm_to_vmem [thread:$0]  %s3, 16384, %s41, [#allocation6], 256, 256, 16
    $region17: #{actor_forward.1} parent=1 // pred_fallthru
      _
    // Predicated region
    $region18: #{actor_forward.1} parent=1 // pred_check
      _
    $region19: #{actor_forward.1} parent=1 // pred_check_branch
      %48 = sbr.rel (0) target = $region21
    $region20: #{actor_forward.1} parent=1 // pred_region
      _
    $region21: #{actor_forward.1} parent=1 // pred_fallthru
      _
    // Predicated region
    $region22: #{actor_forward.1} parent=1 // pred_check
      _
    $region23: #{actor_forward.1} parent=1 // pred_check_branch
      %50 = sbr.rel (0) target = $region25
    $region24: #{actor_forward.1} parent=1 // pred_region
      %s52 = ssub.s32 8192, 8192
      %53 = vsyncadd [#allocation6], %s52
      %s54 = sshll.u32 [#allocation7], 4
      %s55 = int_to_ptr.vmem [resolvable:$true] %s54
      %60 = dma.hbm_to_vmem [thread:$0]  %s5, 8192, %s55, [#allocation6], 128, 128, 8
    $region25: #{actor_forward.1} parent=1 // pred_fallthru
      _
    // Predicated region
    $region26: #{actor_forward.1} parent=1 // pred_check
      _
    $region27: #{actor_forward.1} parent=1 // pred_check_branch
      %62 = sbr.rel (0) target = $region29
    $region28: #{actor_forward.1} parent=1 // pred_region
      _
    $region29: #{actor_forward.1} parent=1 // pred_fallthru
      _
    // Predicated region
    $region30: #{actor_forward.1} parent=1 // pred_check
      _
    $region31: #{actor_forward.1} parent=1 // pred_check_branch
      %64 = sbr.rel (0) target = $region33
    $region32: #{actor_forward.1} parent=1 // pred_region
      %s66 = ssub.s32 2048, 2048
      %67 = vsyncadd [#allocation9], %s66
      %s68 = sshll.u32 [#allocation8], 4
      %s69 = int_to_ptr.vmem [resolvable:$true] %s68
      %74 = dma.hbm_to_vmem [thread:$0]  %s7, 2048, %s69, [#allocation9], 64, 64, 4
    $region33: #{actor_forward.1} parent=1 // pred_fallthru
      _
    // Predicated region
    $region34: #{actor_forward.1} parent=1 // pred_check
      _
    $region35: #{actor_forward.1} parent=1 // pred_check_branch
      %76 = sbr.rel (0) target = $region37
    $region36: #{actor_forward.1} parent=1 // pred_region
      _
    $region37: #{actor_forward.1} parent=1 // pred_fallthru
      _
    // Predicated region
    $region38: #{actor_forward.1} parent=1 // pred_check
      _
    $region39: #{actor_forward.1} parent=1 // pred_check_branch
      %78 = sbr.rel (0) target = $region41
    $region40: #{actor_forward.1} parent=1 // pred_region
      %s80 = ssub.s32 1024, 1024
      %81 = vsyncadd [#allocation9], %s80
      %s82 = sshll.u32 [#allocation10], 4
      %s83 = int_to_ptr.vmem [resolvable:$true] %s82
      %88 = dma.hbm_to_vmem [thread:$0]  %s9, 1024, %s83, [#allocation9], 64, 64, 4
    $region41: #{actor_forward.1} parent=1 // pred_fallthru
      _
    // Predicated region
    $region42: #{actor_forward.1} parent=1 // pred_check
      _
    $region43: #{actor_forward.1} parent=1 // pred_check_branch
      %90 = sbr.rel (0) target = $region45
    $region44: #{actor_forward.1} parent=1 // pred_region
      _
    $region45: #{actor_forward.1} parent=1 // pred_fallthru
      _
    // Predicated region
    $region46: #{actor_forward.1} parent=1 // pred_check
      _
    $region47: #{actor_forward.1} parent=1 // pred_check_branch
      %92 = sbr.rel (0) target = $region49
    $region48: #{actor_forward.1} parent=1 // pred_region
      %93 = dma.done [#allocation4], 4096
    $region49: #{actor_forward.1} parent=1 // pred_fallthru
      _
    // Predicated region
    $region50: #{actor_forward.1} parent=1 // pred_check
      _
    $region51: #{actor_forward.1} parent=1 // pred_check_branch
      %95 = sbr.rel (0) target = $region53
    $region52: #{actor_forward.1} parent=1 // pred_region
      %96 = dma.done [#allocation6], 16384
    $region53: #{actor_forward.1} parent=1 // pred_fallthru
      _
    // Predicated region
    $region54: #{actor_forward.1} parent=1 // pred_check
      _
    $region55: #{actor_forward.1} parent=1 // pred_check_branch
      %98 = sbr.rel (0) target = $region57
    $region56: #{actor_forward.1} parent=1 // pred_region
      %99 = dma.done [#allocation6], 8192
    $region57: #{actor_forward.1} parent=1 // pred_fallthru
      _
    // Predicated region
    $region58: #{actor_forward.1} parent=1 // pred_check
      _
    $region59: #{actor_forward.1} parent=1 // pred_check_branch
      %101 = sbr.rel (0) target = $region61
    $region60: #{actor_forward.1} parent=1 // pred_region
      %102 = dma.done [#allocation9], 2048
    $region61: #{actor_forward.1} parent=1 // pred_fallthru
      _
    // Predicated region
    $region62: #{actor_forward.1} parent=1 // pred_check
      _
    $region63: #{actor_forward.1} parent=1 // pred_check_branch
      %104 = sbr.rel (0) target = $region65
    $region64: #{actor_forward.1} parent=1 // pred_region
      %105 = dma.done [#allocation9], 1024
    $region65: #{actor_forward.1} parent=1 // pred_fallthru
      _
    %107 = vst [vmem:[#allocation2] sm:$0xff] 0
    %v108 = vld [vmem:[%s0] sm:$0xff]
    %v109 = vld [vmem:[%s0 + $0x8] sm:$0xff]
    %v110 = vpack.c.bf16 %v109, %v108
    %vm111 = vcmask 23552
    %112 = vst.msk [vmem:[#allocation2] sm:$0xff] %vm111, %v110
    %v113 = vld [vmem:[#allocation2] sm:$0xff]
    %v114 = vld [vmem:[#allocation3] sm:$0xff]
    %v115 = vld [vmem:[#allocation3 + $0x8] sm:$0xff]
    %v116 = vld [vmem:[#allocation3 + $0x10] sm:$0xff]
    %v117 = vld [vmem:[#allocation3 + $0x18] sm:$0xff]
    %v118 = vld [vmem:[#allocation3 + $0x20] sm:$0xff]
    %v119 = vld [vmem:[#allocation3 + $0x28] sm:$0xff]
    %v120 = vld [vmem:[#allocation3 + $0x30] sm:$0xff]
    %v121 = vld [vmem:[#allocation3 + $0x38] sm:$0xff]
    %v122 = vld [vmem:[#allocation3 + $0x40] sm:$0xff]
    %v123 = vld [vmem:[#allocation3 + $0x48] sm:$0xff]
    %v124 = vld [vmem:[#allocation3 + $0x50] sm:$0xff]
    %v125 = vld [vmem:[#allocation3 + $0x58] sm:$0xff]
    %v126 = vld [vmem:[#allocation3 + $0x60] sm:$0xff]
    %v127 = vld [vmem:[#allocation3 + $0x68] sm:$0xff]
    %v128 = vld [vmem:[#allocation3 + $0x70] sm:$0xff]
    %v129 = vld [vmem:[#allocation3 + $0x78] sm:$0xff]
    %v130 = vld [vmem:[#allocation3 + $0x80] sm:$0xff]
    %v131 = vld [vmem:[#allocation3 + $0x88] sm:$0xff]
    %v132 = vld [vmem:[#allocation3 + $0x90] sm:$0xff]
    %v133 = vld [vmem:[#allocation3 + $0x98] sm:$0xff]
    %v134 = vld [vmem:[#allocation3 + $0xa0] sm:$0xff]
    %v135 = vld [vmem:[#allocation3 + $0xa8] sm:$0xff]
    %v136 = vld [vmem:[#allocation3 + $0xb0] sm:$0xff]
    %v137 = vld [vmem:[#allocation3 + $0xb8] sm:$0xff]
    %v138 = vld [vmem:[#allocation3 + $0xc0] sm:$0xff]
    %v139 = vld [vmem:[#allocation3 + $0xc8] sm:$0xff]
    %v140 = vld [vmem:[#allocation3 + $0xd0] sm:$0xff]
    %v141 = vld [vmem:[#allocation3 + $0xd8] sm:$0xff]
    %v142 = vld [vmem:[#allocation3 + $0xe0] sm:$0xff]
    %v143 = vld [vmem:[#allocation3 + $0xe8] sm:$0xff]
    %v144 = vld [vmem:[#allocation3 + $0xf0] sm:$0xff]
    %v145 = vld [vmem:[#allocation3 + $0xf8] sm:$0xff]
    %v146 = vld [vmem:[%s2] sm:$0xf]
    %v148 = vlaneseq
    %v149 = vshrl.u32 %v148, 7
    %v150 = vsub.s32 0, %v149
    %v151 = vrot.slane %v146, %v150
    %v152 = vlaneseq
    %v153 = vshrl.u32 %v152, 7
    %v154 = vsub.s32 1, %v153
    %v155 = vrot.slane %v146, %v154
    %v156 = vlaneseq
    %v157 = vshrl.u32 %v156, 7
    %v158 = vsub.s32 2, %v157
    %v159 = vrot.slane %v146, %v158
    %v160 = vlaneseq
    %v161 = vshrl.u32 %v160, 7
    %v162 = vsub.s32 3, %v161
    %v163 = vrot.slane %v146, %v162
    %v200 = vunpack.c.l.b16 %v114
    %v201 = vunpack.c.h.b16 %v114
    %v202 = vunpack.c.l.b16 %v115
    %v203 = vunpack.c.h.b16 %v115
    %v204 = vunpack.c.l.b16 %v116
    %v205 = vunpack.c.h.b16 %v116
    %v206 = vunpack.c.l.b16 %v117
    %v207 = vunpack.c.h.b16 %v117
    %v208 = vunpack.c.l.b16 %v118
    %v209 = vunpack.c.h.b16 %v118
    %v210 = vunpack.c.l.b16 %v119
    %v211 = vunpack.c.h.b16 %v119
    %v212 = vunpack.c.l.b16 %v120
    %v213 = vunpack.c.h.b16 %v120
    %v214 = vunpack.c.l.b16 %v121
    %v215 = vunpack.c.h.b16 %v121
    %v216 = vunpack.c.l.b16 %v122
    %v217 = vunpack.c.h.b16 %v122
    %v218 = vunpack.c.l.b16 %v123
    %v219 = vunpack.c.h.b16 %v123
    %v220 = vunpack.c.l.b16 %v124
    %v221 = vunpack.c.h.b16 %v124
    %v222 = vunpack.c.l.b16 %v125
    %v223 = vunpack.c.h.b16 %v125
    %v224 = vunpack.c.l.b16 %v126
    %v225 = vunpack.c.h.b16 %v126
    %v226 = vunpack.c.l.b16 %v127
    %v227 = vunpack.c.h.b16 %v127
    %v228 = vunpack.c.l.b16 %v128
    %v229 = vunpack.c.h.b16 %v128
    %v230 = vunpack.c.l.b16 %v129
    %v231 = vunpack.c.h.b16 %v129
    %v232 = vunpack.c.l.b16 %v130
    %v233 = vunpack.c.h.b16 %v130
    %v234 = vunpack.c.l.b16 %v131
    %v235 = vunpack.c.h.b16 %v131
    %v236 = vunpack.c.l.b16 %v132
    %v237 = vunpack.c.h.b16 %v132
    %v238 = vunpack.c.l.b16 %v133
    %v239 = vunpack.c.h.b16 %v133
    %v240 = vunpack.c.l.b16 %v134
    %v241 = vunpack.c.h.b16 %v134
    %v242 = vunpack.c.l.b16 %v135
    %v243 = vunpack.c.h.b16 %v135
    %v244 = vunpack.c.l.b16 %v136
    %v245 = vunpack.c.h.b16 %v136
    %v246 = vunpack.c.l.b16 %v137
    %v247 = vunpack.c.h.b16 %v137
    %v248 = vunpack.c.l.b16 %v138
    %v249 = vunpack.c.h.b16 %v138
    %v250 = vunpack.c.l.b16 %v139
    %v251 = vunpack.c.h.b16 %v139
    %v252 = vunpack.c.l.b16 %v140
    %v253 = vunpack.c.h.b16 %v140
    %v254 = vunpack.c.l.b16 %v141
    %v255 = vunpack.c.h.b16 %v141
    %v256 = vunpack.c.l.b16 %v142
    %v257 = vunpack.c.h.b16 %v142
    %v258 = vunpack.c.l.b16 %v143
    %v259 = vunpack.c.h.b16 %v143
    %v260 = vunpack.c.l.b16 %v144
    %v261 = vunpack.c.h.b16 %v144
    %v262 = vunpack.c.l.b16 %v145
    %v263 = vunpack.c.h.b16 %v145
    %v264 = vpack.c.b16 %v204, %v200
    %v265 = vpack.c.b16 %v205, %v201
    %v266 = vpack.c.b16 %v206, %v202
    %v267 = vpack.c.b16 %v207, %v203
    %v268 = vpack.c.b16 %v212, %v208
    %v269 = vpack.c.b16 %v213, %v209
    %v270 = vpack.c.b16 %v214, %v210
    %v271 = vpack.c.b16 %v215, %v211
    %v272 = vpack.c.b16 %v220, %v216
    %v273 = vpack.c.b16 %v221, %v217
    %v274 = vpack.c.b16 %v222, %v218
    %v275 = vpack.c.b16 %v223, %v219
    %v276 = vpack.c.b16 %v228, %v224
    %v277 = vpack.c.b16 %v229, %v225
    %v278 = vpack.c.b16 %v230, %v226
    %v279 = vpack.c.b16 %v231, %v227
    %v280 = vpack.c.b16 %v236, %v232
    %v281 = vpack.c.b16 %v237, %v233
    %v282 = vpack.c.b16 %v238, %v234
    %v283 = vpack.c.b16 %v239, %v235
    %v284 = vpack.c.b16 %v244, %v240
    %v285 = vpack.c.b16 %v245, %v241
    %v286 = vpack.c.b16 %v246, %v242
    %v287 = vpack.c.b16 %v247, %v243
    %v288 = vpack.c.b16 %v252, %v248
    %v289 = vpack.c.b16 %v253, %v249
    %v290 = vpack.c.b16 %v254, %v250
    %v291 = vpack.c.b16 %v255, %v251
    %v292 = vpack.c.b16 %v260, %v256
    %v293 = vpack.c.b16 %v261, %v257
    %v294 = vpack.c.b16 %v262, %v258
    %v295 = vpack.c.b16 %v263, %v259
    %328 = vmatprep.subr.bf16.mxu0 %v265
    %329 = vmatpush1.bf16.msra.mxu0 %v264
    %330 = vmatprep.subr.bf16.mxu0 %v269
    %331 = vmatpush1.bf16.msra.mxu0 %v268
    %332 = vmatprep.subr.bf16.mxu0 %v273
    %333 = vmatpush1.bf16.msra.mxu0 %v272
    %334 = vmatprep.subr.bf16.mxu0 %v277
    %335 = vmatpush1.bf16.msra.mxu0 %v276
    %336 = vmatprep.subr.bf16.mxu0 %v281
    %337 = vmatpush1.bf16.msra.mxu0 %v280
    %338 = vmatprep.subr.bf16.mxu0 %v285
    %339 = vmatpush1.bf16.msra.mxu0 %v284
    %340 = vmatprep.subr.bf16.mxu0 %v289
    %341 = vmatpush1.bf16.msra.mxu0 %v288
    %342 = vmatprep.subr.bf16.mxu0 %v293
    %343 = vmatpush1.bf16.msra.mxu0 %v292
    %344 = vmatprep.subr.bf16.mxu0 0
    %345 = vmatpush1.bf16.msra.mxu0 0
    %346 = vmatprep.subr.bf16.mxu0 0
    %347 = vmatpush1.bf16.msra.mxu0 0
    %348 = vmatprep.subr.bf16.mxu0 0
    %349 = vmatpush1.bf16.msra.mxu0 0
    %350 = vmatprep.subr.bf16.mxu0 0
    %351 = vmatpush1.bf16.msra.mxu0 0
    %352 = vmatprep.subr.bf16.mxu0 0
    %353 = vmatpush1.bf16.msra.mxu0 0
    %354 = vmatprep.subr.bf16.mxu0 0
    %355 = vmatpush1.bf16.msra.mxu0 0
    %356 = vmatprep.subr.bf16.mxu0 0
    %357 = vmatpush1.bf16.msra.mxu0 0
    %358 = vmatprep.subr.bf16.mxu0 0
    %359 = vmatpush1.bf16.msra.mxu0 0
    %360 = vmatprep.mubr.bf16.mxu0 0
    %361 = vmatmul.mubr.bf16.gmra.mrb[0].mxu0 %v113
    %v362 = vpop.f32.mrb[0].mxu0
    %v363 = vadd.f32 %v151, %v362
    %v364 = vpop.f32.mrb[0].mxu0
    %v365 = vadd.f32 %v155, %v364
    %v366 = vpop.f32.mrb[0].mxu0
    %v367 = vadd.f32 %v151, %v366
    %v368 = vpop.f32.mrb[0].mxu0
    %v369 = vadd.f32 %v155, %v368
    %370 = vdwg.mxu0
    %371 = vmatprep.subr.bf16.mxu0 %v267
    %372 = vmatpush1.bf16.msra.mxu0 %v266
    %373 = vmatprep.subr.bf16.mxu0 %v271
    %374 = vmatpush1.bf16.msra.mxu0 %v270
    %375 = vmatprep.subr.bf16.mxu0 %v275
    %376 = vmatpush1.bf16.msra.mxu0 %v274
    %377 = vmatprep.subr.bf16.mxu0 %v279
    %378 = vmatpush1.bf16.msra.mxu0 %v278
    %379 = vmatprep.subr.bf16.mxu0 %v283
    %380 = vmatpush1.bf16.msra.mxu0 %v282
    %381 = vmatprep.subr.bf16.mxu0 %v287
    %382 = vmatpush1.bf16.msra.mxu0 %v286
    %383 = vmatprep.subr.bf16.mxu0 %v291
    %384 = vmatpush1.bf16.msra.mxu0 %v290
    %385 = vmatprep.subr.bf16.mxu0 %v295
    %386 = vmatpush1.bf16.msra.mxu0 %v294
    %387 = vmatprep.subr.bf16.mxu0 0
    %388 = vmatpush1.bf16.msra.mxu0 0
    %389 = vmatprep.subr.bf16.mxu0 0
    %390 = vmatpush1.bf16.msra.mxu0 0
    %391 = vmatprep.subr.bf16.mxu0 0
    %392 = vmatpush1.bf16.msra.mxu0 0
    %393 = vmatprep.subr.bf16.mxu0 0
    %394 = vmatpush1.bf16.msra.mxu0 0
    %395 = vmatprep.subr.bf16.mxu0 0
    %396 = vmatpush1.bf16.msra.mxu0 0
    %397 = vmatprep.subr.bf16.mxu0 0
    %398 = vmatpush1.bf16.msra.mxu0 0
    %399 = vmatprep.subr.bf16.mxu0 0
    %400 = vmatpush1.bf16.msra.mxu0 0
    %401 = vmatprep.subr.bf16.mxu0 0
    %402 = vmatpush1.bf16.msra.mxu0 0
    %403 = vmatprep.mubr.bf16.mxu0 0
    %404 = vmatmul.mubr.bf16.gmra.mrb[0].mxu0 %v113
    %v405 = vpop.f32.mrb[0].mxu0
    %v406 = vadd.f32 %v159, %v405
    %v407 = vpop.f32.mrb[0].mxu0
    %v408 = vadd.f32 %v163, %v407
    %v409 = vpop.f32.mrb[0].mxu0
    %v410 = vadd.f32 %v159, %v409
    %v411 = vpop.f32.mrb[0].mxu0
    %v412 = vadd.f32 %v163, %v411
    %413 = vdwg.mxu0
    %v414 = vmax.f32 %v363, 0.0
    %v415 = vmax.f32 %v365, 0.0
    %v416 = vmax.f32 %v406, 0.0
    %v417 = vmax.f32 %v408, 0.0
    %v418 = vmax.f32 %v367, 0.0
    %v419 = vmax.f32 %v369, 0.0
    %v420 = vmax.f32 %v410, 0.0
    %v421 = vmax.f32 %v412, 0.0
    %v422 = vpack.c.bf16 %v418, %v414
    %v423 = vpack.c.bf16 %v419, %v415
    %v424 = vpack.c.bf16 %v420, %v416
    %v425 = vpack.c.bf16 %v421, %v417
    %v426 = vld [vmem:[#allocation5] sm:$0xff]
    %v427 = vld [vmem:[#allocation5 + $0x8] sm:$0xff]
    %v428 = vld [vmem:[#allocation5 + $0x10] sm:$0xff]
    %v429 = vld [vmem:[#allocation5 + $0x18] sm:$0xff]
    %v430 = vld [vmem:[#allocation5 + $0x20] sm:$0xff]
    %v431 = vld [vmem:[#allocation5 + $0x28] sm:$0xff]
    %v432 = vld [vmem:[#allocation5 + $0x30] sm:$0xff]
    %v433 = vld [vmem:[#allocation5 + $0x38] sm:$0xff]
    %v434 = vld [vmem:[#allocation5 + $0x40] sm:$0xff]
    %v435 = vld [vmem:[#allocation5 + $0x48] sm:$0xff]
    %v436 = vld [vmem:[#allocation5 + $0x50] sm:$0xff]
    %v437 = vld [vmem:[#allocation5 + $0x58] sm:$0xff]
    %v438 = vld [vmem:[#allocation5 + $0x60] sm:$0xff]
    %v439 = vld [vmem:[#allocation5 + $0x68] sm:$0xff]
    %v440 = vld [vmem:[#allocation5 + $0x70] sm:$0xff]
    %v441 = vld [vmem:[#allocation5 + $0x78] sm:$0xff]
    %v442 = vld [vmem:[#allocation5 + $0x80] sm:$0xff]
    %v443 = vld [vmem:[#allocation5 + $0x88] sm:$0xff]
    %v444 = vld [vmem:[#allocation5 + $0x90] sm:$0xff]
    %v445 = vld [vmem:[#allocation5 + $0x98] sm:$0xff]
    %v446 = vld [vmem:[#allocation5 + $0xa0] sm:$0xff]
    %v447 = vld [vmem:[#allocation5 + $0xa8] sm:$0xff]
    %v448 = vld [vmem:[#allocation5 + $0xb0] sm:$0xff]
    %v449 = vld [vmem:[#allocation5 + $0xb8] sm:$0xff]
    %v450 = vld [vmem:[#allocation5 + $0xc0] sm:$0xff]
    %v451 = vld [vmem:[#allocation5 + $0xc8] sm:$0xff]
    %v452 = vld [vmem:[#allocation5 + $0xd0] sm:$0xff]
    %v453 = vld [vmem:[#allocation5 + $0xd8] sm:$0xff]
    %v454 = vld [vmem:[#allocation5 + $0xe0] sm:$0xff]
    %v455 = vld [vmem:[#allocation5 + $0xe8] sm:$0xff]
    %v456 = vld [vmem:[#allocation5 + $0xf0] sm:$0xff]
    %v457 = vld [vmem:[#allocation5 + $0xf8] sm:$0xff]
    %v458 = vld [vmem:[#allocation5 + $0x100] sm:$0xff]
    %v459 = vld [vmem:[#allocation5 + $0x108] sm:$0xff]
    %v460 = vld [vmem:[#allocation5 + $0x110] sm:$0xff]
    %v461 = vld [vmem:[#allocation5 + $0x118] sm:$0xff]
    %v462 = vld [vmem:[#allocation5 + $0x120] sm:$0xff]
    %v463 = vld [vmem:[#allocation5 + $0x128] sm:$0xff]
    %v464 = vld [vmem:[#allocation5 + $0x130] sm:$0xff]
    %v465 = vld [vmem:[#allocation5 + $0x138] sm:$0xff]
    %v466 = vld [vmem:[#allocation5 + $0x140] sm:$0xff]
    %v467 = vld [vmem:[#allocation5 + $0x148] sm:$0xff]
    %v468 = vld [vmem:[#allocation5 + $0x150] sm:$0xff]
    %v469 = vld [vmem:[#allocation5 + $0x158] sm:$0xff]
    %v470 = vld [vmem:[#allocation5 + $0x160] sm:$0xff]
    %v471 = vld [vmem:[#allocation5 + $0x168] sm:$0xff]
    %v472 = vld [vmem:[#allocation5 + $0x170] sm:$0xff]
    %v473 = vld [vmem:[#allocation5 + $0x178] sm:$0xff]
    %v474 = vld [vmem:[#allocation5 + $0x180] sm:$0xff]
    %v475 = vld [vmem:[#allocation5 + $0x188] sm:$0xff]
    %v476 = vld [vmem:[#allocation5 + $0x190] sm:$0xff]
    %v477 = vld [vmem:[#allocation5 + $0x198] sm:$0xff]
    %v478 = vld [vmem:[#allocation5 + $0x1a0] sm:$0xff]
    %v479 = vld [vmem:[#allocation5 + $0x1a8] sm:$0xff]
    %v480 = vld [vmem:[#allocation5 + $0x1b0] sm:$0xff]
    %v481 = vld [vmem:[#allocation5 + $0x1b8] sm:$0xff]
    %v482 = vld [vmem:[#allocation5 + $0x1c0] sm:$0xff]
    %v483 = vld [vmem:[#allocation5 + $0x1c8] sm:$0xff]
    %v484 = vld [vmem:[#allocation5 + $0x1d0] sm:$0xff]
    %v485 = vld [vmem:[#allocation5 + $0x1d8] sm:$0xff]
    %v486 = vld [vmem:[#allocation5 + $0x1e0] sm:$0xff]
    %v487 = vld [vmem:[#allocation5 + $0x1e8] sm:$0xff]
    %v488 = vld [vmem:[#allocation5 + $0x1f0] sm:$0xff]
    %v489 = vld [vmem:[#allocation5 + $0x1f8] sm:$0xff]
    %v490 = vld [vmem:[#allocation5 + $0x200] sm:$0xff]
    %v491 = vld [vmem:[#allocation5 + $0x208] sm:$0xff]
    %v492 = vld [vmem:[#allocation5 + $0x210] sm:$0xff]
    %v493 = vld [vmem:[#allocation5 + $0x218] sm:$0xff]
    %v494 = vld [vmem:[#allocation5 + $0x220] sm:$0xff]
    %v495 = vld [vmem:[#allocation5 + $0x228] sm:$0xff]
    %v496 = vld [vmem:[#allocation5 + $0x230] sm:$0xff]
    %v497 = vld [vmem:[#allocation5 + $0x238] sm:$0xff]
    %v498 = vld [vmem:[#allocation5 + $0x240] sm:$0xff]
    %v499 = vld [vmem:[#allocation5 + $0x248] sm:$0xff]
    %v500 = vld [vmem:[#allocation5 + $0x250] sm:$0xff]
    %v501 = vld [vmem:[#allocation5 + $0x258] sm:$0xff]
    %v502 = vld [vmem:[#allocation5 + $0x260] sm:$0xff]
    %v503 = vld [vmem:[#allocation5 + $0x268] sm:$0xff]
    %v504 = vld [vmem:[#allocation5 + $0x270] sm:$0xff]
    %v505 = vld [vmem:[#allocation5 + $0x278] sm:$0xff]
    %v506 = vld [vmem:[#allocation5 + $0x280] sm:$0xff]
    %v507 = vld [vmem:[#allocation5 + $0x288] sm:$0xff]
    %v508 = vld [vmem:[#allocation5 + $0x290] sm:$0xff]
    %v509 = vld [vmem:[#allocation5 + $0x298] sm:$0xff]
    %v510 = vld [vmem:[#allocation5 + $0x2a0] sm:$0xff]
    %v511 = vld [vmem:[#allocation5 + $0x2a8] sm:$0xff]
    %v512 = vld [vmem:[#allocation5 + $0x2b0] sm:$0xff]
    %v513 = vld [vmem:[#allocation5 + $0x2b8] sm:$0xff]
    %v514 = vld [vmem:[#allocation5 + $0x2c0] sm:$0xff]
    %v515 = vld [vmem:[#allocation5 + $0x2c8] sm:$0xff]
    %v516 = vld [vmem:[#allocation5 + $0x2d0] sm:$0xff]
    %v517 = vld [vmem:[#allocation5 + $0x2d8] sm:$0xff]
    %v518 = vld [vmem:[#allocation5 + $0x2e0] sm:$0xff]
    %v519 = vld [vmem:[#allocation5 + $0x2e8] sm:$0xff]
    %v520 = vld [vmem:[#allocation5 + $0x2f0] sm:$0xff]
    %v521 = vld [vmem:[#allocation5 + $0x2f8] sm:$0xff]
    %v522 = vld [vmem:[#allocation5 + $0x300] sm:$0xff]
    %v523 = vld [vmem:[#allocation5 + $0x308] sm:$0xff]
    %v524 = vld [vmem:[#allocation5 + $0x310] sm:$0xff]
    %v525 = vld [vmem:[#allocation5 + $0x318] sm:$0xff]
    %v526 = vld [vmem:[#allocation5 + $0x320] sm:$0xff]
    %v527 = vld [vmem:[#allocation5 + $0x328] sm:$0xff]
    %v528 = vld [vmem:[#allocation5 + $0x330] sm:$0xff]
    %v529 = vld [vmem:[#allocation5 + $0x338] sm:$0xff]
    %v530 = vld [vmem:[#allocation5 + $0x340] sm:$0xff]
    %v531 = vld [vmem:[#allocation5 + $0x348] sm:$0xff]
    %v532 = vld [vmem:[#allocation5 + $0x350] sm:$0xff]
    %v533 = vld [vmem:[#allocation5 + $0x358] sm:$0xff]
    %v534 = vld [vmem:[#allocation5 + $0x360] sm:$0xff]
    %v535 = vld [vmem:[#allocation5 + $0x368] sm:$0xff]
    %v536 = vld [vmem:[#allocation5 + $0x370] sm:$0xff]
    %v537 = vld [vmem:[#allocation5 + $0x378] sm:$0xff]
    %v538 = vld [vmem:[#allocation5 + $0x380] sm:$0xff]
    %v539 = vld [vmem:[#allocation5 + $0x388] sm:$0xff]
    %v540 = vld [vmem:[#allocation5 + $0x390] sm:$0xff]
    %v541 = vld [vmem:[#allocation5 + $0x398] sm:$0xff]
    %v542 = vld [vmem:[#allocation5 + $0x3a0] sm:$0xff]
    %v543 = vld [vmem:[#allocation5 + $0x3a8] sm:$0xff]
    %v544 = vld [vmem:[#allocation5 + $0x3b0] sm:$0xff]
    %v545 = vld [vmem:[#allocation5 + $0x3b8] sm:$0xff]
    %v546 = vld [vmem:[#allocation5 + $0x3c0] sm:$0xff]
    %v547 = vld [vmem:[#allocation5 + $0x3c8] sm:$0xff]
    %v548 = vld [vmem:[#allocation5 + $0x3d0] sm:$0xff]
    %v549 = vld [vmem:[#allocation5 + $0x3d8] sm:$0xff]
    %v550 = vld [vmem:[#allocation5 + $0x3e0] sm:$0xff]
    %v551 = vld [vmem:[#allocation5 + $0x3e8] sm:$0xff]
    %v552 = vld [vmem:[#allocation5 + $0x3f0] sm:$0xff]
    %v553 = vld [vmem:[#allocation5 + $0x3f8] sm:$0xff]
    %v554 = vld [vmem:[%s4] sm:$0xf]
    %v556 = vlaneseq
    %v557 = vshrl.u32 %v556, 7
    %v558 = vsub.s32 0, %v557
    %v559 = vrot.slane %v554, %v558
    %v560 = vlaneseq
    %v561 = vshrl.u32 %v560, 7
    %v562 = vsub.s32 1, %v561
    %v563 = vrot.slane %v554, %v562
    %v564 = vlaneseq
    %v565 = vshrl.u32 %v564, 7
    %v566 = vsub.s32 2, %v565
    %v567 = vrot.slane %v554, %v566
    %v568 = vlaneseq
    %v569 = vshrl.u32 %v568, 7
    %v570 = vsub.s32 3, %v569
    %v571 = vrot.slane %v554, %v570
    %v704 = vunpack.c.l.b16 %v426
    %v705 = vunpack.c.h.b16 %v426
    %v706 = vunpack.c.l.b16 %v427
    %v707 = vunpack.c.h.b16 %v427
    %v708 = vunpack.c.l.b16 %v428
    %v709 = vunpack.c.h.b16 %v428
    %v710 = vunpack.c.l.b16 %v429
    %v711 = vunpack.c.h.b16 %v429
    %v712 = vunpack.c.l.b16 %v430
    %v713 = vunpack.c.h.b16 %v430
    %v714 = vunpack.c.l.b16 %v431
    %v715 = vunpack.c.h.b16 %v431
    %v716 = vunpack.c.l.b16 %v432
    %v717 = vunpack.c.h.b16 %v432
    %v718 = vunpack.c.l.b16 %v433
    %v719 = vunpack.c.h.b16 %v433
    %v720 = vunpack.c.l.b16 %v434
    %v721 = vunpack.c.h.b16 %v434
    %v722 = vunpack.c.l.b16 %v435
    %v723 = vunpack.c.h.b16 %v435
    %v724 = vunpack.c.l.b16 %v436
    %v725 = vunpack.c.h.b16 %v436
    %v726 = vunpack.c.l.b16 %v437
    %v727 = vunpack.c.h.b16 %v437
    %v728 = vunpack.c.l.b16 %v438
    %v729 = vunpack.c.h.b16 %v438
    %v730 = vunpack.c.l.b16 %v439
    %v731 = vunpack.c.h.b16 %v439
    %v732 = vunpack.c.l.b16 %v440
    %v733 = vunpack.c.h.b16 %v440
    %v734 = vunpack.c.l.b16 %v441
    %v735 = vunpack.c.h.b16 %v441
    %v736 = vunpack.c.l.b16 %v442
    %v737 = vunpack.c.h.b16 %v442
    %v738 = vunpack.c.l.b16 %v443
    %v739 = vunpack.c.h.b16 %v443
    %v740 = vunpack.c.l.b16 %v444
    %v741 = vunpack.c.h.b16 %v444
    %v742 = vunpack.c.l.b16 %v445
    %v743 = vunpack.c.h.b16 %v445
    %v744 = vunpack.c.l.b16 %v446
    %v745 = vunpack.c.h.b16 %v446
    %v746 = vunpack.c.l.b16 %v447
    %v747 = vunpack.c.h.b16 %v447
    %v748 = vunpack.c.l.b16 %v448
    %v749 = vunpack.c.h.b16 %v448
    %v750 = vunpack.c.l.b16 %v449
    %v751 = vunpack.c.h.b16 %v449
    %v752 = vunpack.c.l.b16 %v450
    %v753 = vunpack.c.h.b16 %v450
    %v754 = vunpack.c.l.b16 %v451
    %v755 = vunpack.c.h.b16 %v451
    %v756 = vunpack.c.l.b16 %v452
    %v757 = vunpack.c.h.b16 %v452
    %v758 = vunpack.c.l.b16 %v453
    %v759 = vunpack.c.h.b16 %v453
    %v760 = vunpack.c.l.b16 %v454
    %v761 = vunpack.c.h.b16 %v454
    %v762 = vunpack.c.l.b16 %v455
    %v763 = vunpack.c.h.b16 %v455
    %v764 = vunpack.c.l.b16 %v456
    %v765 = vunpack.c.h.b16 %v456
    %v766 = vunpack.c.l.b16 %v457
    %v767 = vunpack.c.h.b16 %v457
    %v768 = vunpack.c.l.b16 %v458
    %v769 = vunpack.c.h.b16 %v458
    %v770 = vunpack.c.l.b16 %v459
    %v771 = vunpack.c.h.b16 %v459
    %v772 = vunpack.c.l.b16 %v460
    %v773 = vunpack.c.h.b16 %v460
    %v774 = vunpack.c.l.b16 %v461
    %v775 = vunpack.c.h.b16 %v461
    %v776 = vunpack.c.l.b16 %v462
    %v777 = vunpack.c.h.b16 %v462
    %v778 = vunpack.c.l.b16 %v463
    %v779 = vunpack.c.h.b16 %v463
    %v780 = vunpack.c.l.b16 %v464
    %v781 = vunpack.c.h.b16 %v464
    %v782 = vunpack.c.l.b16 %v465
    %v783 = vunpack.c.h.b16 %v465
    %v784 = vunpack.c.l.b16 %v466
    %v785 = vunpack.c.h.b16 %v466
    %v786 = vunpack.c.l.b16 %v467
    %v787 = vunpack.c.h.b16 %v467
    %v788 = vunpack.c.l.b16 %v468
    %v789 = vunpack.c.h.b16 %v468
    %v790 = vunpack.c.l.b16 %v469
    %v791 = vunpack.c.h.b16 %v469
    %v792 = vunpack.c.l.b16 %v470
    %v793 = vunpack.c.h.b16 %v470
    %v794 = vunpack.c.l.b16 %v471
    %v795 = vunpack.c.h.b16 %v471
    %v796 = vunpack.c.l.b16 %v472
    %v797 = vunpack.c.h.b16 %v472
    %v798 = vunpack.c.l.b16 %v473
    %v799 = vunpack.c.h.b16 %v473
    %v800 = vunpack.c.l.b16 %v474
    %v801 = vunpack.c.h.b16 %v474
    %v802 = vunpack.c.l.b16 %v475
    %v803 = vunpack.c.h.b16 %v475
    %v804 = vunpack.c.l.b16 %v476
    %v805 = vunpack.c.h.b16 %v476
    %v806 = vunpack.c.l.b16 %v477
    %v807 = vunpack.c.h.b16 %v477
    %v808 = vunpack.c.l.b16 %v478
    %v809 = vunpack.c.h.b16 %v478
    %v810 = vunpack.c.l.b16 %v479
    %v811 = vunpack.c.h.b16 %v479
    %v812 = vunpack.c.l.b16 %v480
    %v813 = vunpack.c.h.b16 %v480
    %v814 = vunpack.c.l.b16 %v481
    %v815 = vunpack.c.h.b16 %v481
    %v816 = vunpack.c.l.b16 %v482
    %v817 = vunpack.c.h.b16 %v482
    %v818 = vunpack.c.l.b16 %v483
    %v819 = vunpack.c.h.b16 %v483
    %v820 = vunpack.c.l.b16 %v484
    %v821 = vunpack.c.h.b16 %v484
    %v822 = vunpack.c.l.b16 %v485
    %v823 = vunpack.c.h.b16 %v485
    %v824 = vunpack.c.l.b16 %v486
    %v825 = vunpack.c.h.b16 %v486
    %v826 = vunpack.c.l.b16 %v487
    %v827 = vunpack.c.h.b16 %v487
    %v828 = vunpack.c.l.b16 %v488
    %v829 = vunpack.c.h.b16 %v488
    %v830 = vunpack.c.l.b16 %v489
    %v831 = vunpack.c.h.b16 %v489
    %v832 = vunpack.c.l.b16 %v490
    %v833 = vunpack.c.h.b16 %v490
    %v834 = vunpack.c.l.b16 %v491
    %v835 = vunpack.c.h.b16 %v491
    %v836 = vunpack.c.l.b16 %v492
    %v837 = vunpack.c.h.b16 %v492
    %v838 = vunpack.c.l.b16 %v493
    %v839 = vunpack.c.h.b16 %v493
    %v840 = vunpack.c.l.b16 %v494
    %v841 = vunpack.c.h.b16 %v494
    %v842 = vunpack.c.l.b16 %v495
    %v843 = vunpack.c.h.b16 %v495
    %v844 = vunpack.c.l.b16 %v496
    %v845 = vunpack.c.h.b16 %v496
    %v846 = vunpack.c.l.b16 %v497
    %v847 = vunpack.c.h.b16 %v497
    %v848 = vunpack.c.l.b16 %v498
    %v849 = vunpack.c.h.b16 %v498
    %v850 = vunpack.c.l.b16 %v499
    %v851 = vunpack.c.h.b16 %v499
    %v852 = vunpack.c.l.b16 %v500
    %v853 = vunpack.c.h.b16 %v500
    %v854 = vunpack.c.l.b16 %v501
    %v855 = vunpack.c.h.b16 %v501
    %v856 = vunpack.c.l.b16 %v502
    %v857 = vunpack.c.h.b16 %v502
    %v858 = vunpack.c.l.b16 %v503
    %v859 = vunpack.c.h.b16 %v503
    %v860 = vunpack.c.l.b16 %v504
    %v861 = vunpack.c.h.b16 %v504
    %v862 = vunpack.c.l.b16 %v505
    %v863 = vunpack.c.h.b16 %v505
    %v864 = vunpack.c.l.b16 %v506
    %v865 = vunpack.c.h.b16 %v506
    %v866 = vunpack.c.l.b16 %v507
    %v867 = vunpack.c.h.b16 %v507
    %v868 = vunpack.c.l.b16 %v508
    %v869 = vunpack.c.h.b16 %v508
    %v870 = vunpack.c.l.b16 %v509
    %v871 = vunpack.c.h.b16 %v509
    %v872 = vunpack.c.l.b16 %v510
    %v873 = vunpack.c.h.b16 %v510
    %v874 = vunpack.c.l.b16 %v511
    %v875 = vunpack.c.h.b16 %v511
    %v876 = vunpack.c.l.b16 %v512
    %v877 = vunpack.c.h.b16 %v512
    %v878 = vunpack.c.l.b16 %v513
    %v879 = vunpack.c.h.b16 %v513
    %v880 = vunpack.c.l.b16 %v514
    %v881 = vunpack.c.h.b16 %v514
    %v882 = vunpack.c.l.b16 %v515
    %v883 = vunpack.c.h.b16 %v515
    %v884 = vunpack.c.l.b16 %v516
    %v885 = vunpack.c.h.b16 %v516
    %v886 = vunpack.c.l.b16 %v517
    %v887 = vunpack.c.h.b16 %v517
    %v888 = vunpack.c.l.b16 %v518
    %v889 = vunpack.c.h.b16 %v518
    %v890 = vunpack.c.l.b16 %v519
    %v891 = vunpack.c.h.b16 %v519
    %v892 = vunpack.c.l.b16 %v520
    %v893 = vunpack.c.h.b16 %v520
    %v894 = vunpack.c.l.b16 %v521
    %v895 = vunpack.c.h.b16 %v521
    %v896 = vunpack.c.l.b16 %v522
    %v897 = vunpack.c.h.b16 %v522
    %v898 = vunpack.c.l.b16 %v523
    %v899 = vunpack.c.h.b16 %v523
    %v900 = vunpack.c.l.b16 %v524
    %v901 = vunpack.c.h.b16 %v524
    %v902 = vunpack.c.l.b16 %v525
    %v903 = vunpack.c.h.b16 %v525
    %v904 = vunpack.c.l.b16 %v526
    %v905 = vunpack.c.h.b16 %v526
    %v906 = vunpack.c.l.b16 %v527
    %v907 = vunpack.c.h.b16 %v527
    %v908 = vunpack.c.l.b16 %v528
    %v909 = vunpack.c.h.b16 %v528
    %v910 = vunpack.c.l.b16 %v529
    %v911 = vunpack.c.h.b16 %v529
    %v912 = vunpack.c.l.b16 %v530
    %v913 = vunpack.c.h.b16 %v530
    %v914 = vunpack.c.l.b16 %v531
    %v915 = vunpack.c.h.b16 %v531
    %v916 = vunpack.c.l.b16 %v532
    %v917 = vunpack.c.h.b16 %v532
    %v918 = vunpack.c.l.b16 %v533
    %v919 = vunpack.c.h.b16 %v533
    %v920 = vunpack.c.l.b16 %v534
    %v921 = vunpack.c.h.b16 %v534
    %v922 = vunpack.c.l.b16 %v535
    %v923 = vunpack.c.h.b16 %v535
    %v924 = vunpack.c.l.b16 %v536
    %v925 = vunpack.c.h.b16 %v536
    %v926 = vunpack.c.l.b16 %v537
    %v927 = vunpack.c.h.b16 %v537
    %v928 = vunpack.c.l.b16 %v538
    %v929 = vunpack.c.h.b16 %v538
    %v930 = vunpack.c.l.b16 %v539
    %v931 = vunpack.c.h.b16 %v539
    %v932 = vunpack.c.l.b16 %v540
    %v933 = vunpack.c.h.b16 %v540
    %v934 = vunpack.c.l.b16 %v541
    %v935 = vunpack.c.h.b16 %v541
    %v936 = vunpack.c.l.b16 %v542
    %v937 = vunpack.c.h.b16 %v542
    %v938 = vunpack.c.l.b16 %v543
    %v939 = vunpack.c.h.b16 %v543
    %v940 = vunpack.c.l.b16 %v544
    %v941 = vunpack.c.h.b16 %v544
    %v942 = vunpack.c.l.b16 %v545
    %v943 = vunpack.c.h.b16 %v545
    %v944 = vunpack.c.l.b16 %v546
    %v945 = vunpack.c.h.b16 %v546
    %v946 = vunpack.c.l.b16 %v547
    %v947 = vunpack.c.h.b16 %v547
    %v948 = vunpack.c.l.b16 %v548
    %v949 = vunpack.c.h.b16 %v548
    %v950 = vunpack.c.l.b16 %v549
    %v951 = vunpack.c.h.b16 %v549
    %v952 = vunpack.c.l.b16 %v550
    %v953 = vunpack.c.h.b16 %v550
    %v954 = vunpack.c.l.b16 %v551
    %v955 = vunpack.c.h.b16 %v551
    %v956 = vunpack.c.l.b16 %v552
    %v957 = vunpack.c.h.b16 %v552
    %v958 = vunpack.c.l.b16 %v553
    %v959 = vunpack.c.h.b16 %v553
    %v960 = vpack.c.b16 %v708, %v704
    %v961 = vpack.c.b16 %v709, %v705
    %v962 = vpack.c.b16 %v710, %v706
    %v963 = vpack.c.b16 %v711, %v707
    %v964 = vpack.c.b16 %v716, %v712
    %v965 = vpack.c.b16 %v717, %v713
    %v966 = vpack.c.b16 %v718, %v714
    %v967 = vpack.c.b16 %v719, %v715
    %v968 = vpack.c.b16 %v724, %v720
    %v969 = vpack.c.b16 %v725, %v721
    %v970 = vpack.c.b16 %v726, %v722
    %v971 = vpack.c.b16 %v727, %v723
    %v972 = vpack.c.b16 %v732, %v728
    %v973 = vpack.c.b16 %v733, %v729
    %v974 = vpack.c.b16 %v734, %v730
    %v975 = vpack.c.b16 %v735, %v731
    %v976 = vpack.c.b16 %v740, %v736
    %v977 = vpack.c.b16 %v741, %v737
    %v978 = vpack.c.b16 %v742, %v738
    %v979 = vpack.c.b16 %v743, %v739
    %v980 = vpack.c.b16 %v748, %v744
    %v981 = vpack.c.b16 %v749, %v745
    %v982 = vpack.c.b16 %v750, %v746
    %v983 = vpack.c.b16 %v751, %v747
    %v984 = vpack.c.b16 %v756, %v752
    %v985 = vpack.c.b16 %v757, %v753
    %v986 = vpack.c.b16 %v758, %v754
    %v987 = vpack.c.b16 %v759, %v755
    %v988 = vpack.c.b16 %v764, %v760
    %v989 = vpack.c.b16 %v765, %v761
    %v990 = vpack.c.b16 %v766, %v762
    %v991 = vpack.c.b16 %v767, %v763
    %v992 = vpack.c.b16 %v772, %v768
    %v993 = vpack.c.b16 %v773, %v769
    %v994 = vpack.c.b16 %v774, %v770
    %v995 = vpack.c.b16 %v775, %v771
    %v996 = vpack.c.b16 %v780, %v776
    %v997 = vpack.c.b16 %v781, %v777
    %v998 = vpack.c.b16 %v782, %v778
    %v999 = vpack.c.b16 %v783, %v779
    %v1000 = vpack.c.b16 %v788, %v784
    %v1001 = vpack.c.b16 %v789, %v785
    %v1002 = vpack.c.b16 %v790, %v786
    %v1003 = vpack.c.b16 %v791, %v787
    %v1004 = vpack.c.b16 %v796, %v792
    %v1005 = vpack.c.b16 %v797, %v793
    %v1006 = vpack.c.b16 %v798, %v794
    %v1007 = vpack.c.b16 %v799, %v795
    %v1008 = vpack.c.b16 %v804, %v800
    %v1009 = vpack.c.b16 %v805, %v801
    %v1010 = vpack.c.b16 %v806, %v802
    %v1011 = vpack.c.b16 %v807, %v803
    %v1012 = vpack.c.b16 %v812, %v808
    %v1013 = vpack.c.b16 %v813, %v809
    %v1014 = vpack.c.b16 %v814, %v810
    %v1015 = vpack.c.b16 %v815, %v811
    %v1016 = vpack.c.b16 %v820, %v816
    %v1017 = vpack.c.b16 %v821, %v817
    %v1018 = vpack.c.b16 %v822, %v818
    %v1019 = vpack.c.b16 %v823, %v819
    %v1020 = vpack.c.b16 %v828, %v824
    %v1021 = vpack.c.b16 %v829, %v825
    %v1022 = vpack.c.b16 %v830, %v826
    %v1023 = vpack.c.b16 %v831, %v827
    %v1024 = vpack.c.b16 %v836, %v832
    %v1025 = vpack.c.b16 %v837, %v833
    %v1026 = vpack.c.b16 %v838, %v834
    %v1027 = vpack.c.b16 %v839, %v835
    %v1028 = vpack.c.b16 %v844, %v840
    %v1029 = vpack.c.b16 %v845, %v841
    %v1030 = vpack.c.b16 %v846, %v842
    %v1031 = vpack.c.b16 %v847, %v843
    %v1032 = vpack.c.b16 %v852, %v848
    %v1033 = vpack.c.b16 %v853, %v849
    %v1034 = vpack.c.b16 %v854, %v850
    %v1035 = vpack.c.b16 %v855, %v851
    %v1036 = vpack.c.b16 %v860, %v856
    %v1037 = vpack.c.b16 %v861, %v857
    %v1038 = vpack.c.b16 %v862, %v858
    %v1039 = vpack.c.b16 %v863, %v859
    %v1040 = vpack.c.b16 %v868, %v864
    %v1041 = vpack.c.b16 %v869, %v865
    %v1042 = vpack.c.b16 %v870, %v866
    %v1043 = vpack.c.b16 %v871, %v867
    %v1044 = vpack.c.b16 %v876, %v872
    %v1045 = vpack.c.b16 %v877, %v873
    %v1046 = vpack.c.b16 %v878, %v874
    %v1047 = vpack.c.b16 %v879, %v875
    %v1048 = vpack.c.b16 %v884, %v880
    %v1049 = vpack.c.b16 %v885, %v881
    %v1050 = vpack.c.b16 %v886, %v882
    %v1051 = vpack.c.b16 %v887, %v883
    %v1052 = vpack.c.b16 %v892, %v888
    %v1053 = vpack.c.b16 %v893, %v889
    %v1054 = vpack.c.b16 %v894, %v890
    %v1055 = vpack.c.b16 %v895, %v891
    %v1056 = vpack.c.b16 %v900, %v896
    %v1057 = vpack.c.b16 %v901, %v897
    %v1058 = vpack.c.b16 %v902, %v898
    %v1059 = vpack.c.b16 %v903, %v899
    %v1060 = vpack.c.b16 %v908, %v904
    %v1061 = vpack.c.b16 %v909, %v905
    %v1062 = vpack.c.b16 %v910, %v906
    %v1063 = vpack.c.b16 %v911, %v907
    %v1064 = vpack.c.b16 %v916, %v912
    %v1065 = vpack.c.b16 %v917, %v913
    %v1066 = vpack.c.b16 %v918, %v914
    %v1067 = vpack.c.b16 %v919, %v915
    %v1068 = vpack.c.b16 %v924, %v920
    %v1069 = vpack.c.b16 %v925, %v921
    %v1070 = vpack.c.b16 %v926, %v922
    %v1071 = vpack.c.b16 %v927, %v923
    %v1072 = vpack.c.b16 %v932, %v928
    %v1073 = vpack.c.b16 %v933, %v929
    %v1074 = vpack.c.b16 %v934, %v930
    %v1075 = vpack.c.b16 %v935, %v931
    %v1076 = vpack.c.b16 %v940, %v936
    %v1077 = vpack.c.b16 %v941, %v937
    %v1078 = vpack.c.b16 %v942, %v938
    %v1079 = vpack.c.b16 %v943, %v939
    %v1080 = vpack.c.b16 %v948, %v944
    %v1081 = vpack.c.b16 %v949, %v945
    %v1082 = vpack.c.b16 %v950, %v946
    %v1083 = vpack.c.b16 %v951, %v947
    %v1084 = vpack.c.b16 %v956, %v952
    %v1085 = vpack.c.b16 %v957, %v953
    %v1086 = vpack.c.b16 %v958, %v954
    %v1087 = vpack.c.b16 %v959, %v955
    %1216 = vmatprep.subr.bf16.mxu0 %v961
    %1217 = vmatpush1.bf16.msra.mxu0 %v960
    %1218 = vmatprep.subr.bf16.mxu0 %v965
    %1219 = vmatpush1.bf16.msra.mxu0 %v964
    %1220 = vmatprep.subr.bf16.mxu0 %v969
    %1221 = vmatpush1.bf16.msra.mxu0 %v968
    %1222 = vmatprep.subr.bf16.mxu0 %v973
    %1223 = vmatpush1.bf16.msra.mxu0 %v972
    %1224 = vmatprep.subr.bf16.mxu0 %v977
    %1225 = vmatpush1.bf16.msra.mxu0 %v976
    %1226 = vmatprep.subr.bf16.mxu0 %v981
    %1227 = vmatpush1.bf16.msra.mxu0 %v980
    %1228 = vmatprep.subr.bf16.mxu0 %v985
    %1229 = vmatpush1.bf16.msra.mxu0 %v984
    %1230 = vmatprep.subr.bf16.mxu0 %v989
    %1231 = vmatpush1.bf16.msra.mxu0 %v988
    %1232 = vmatprep.subr.bf16.mxu0 %v993
    %1233 = vmatpush1.bf16.msra.mxu0 %v992
    %1234 = vmatprep.subr.bf16.mxu0 %v997
    %1235 = vmatpush1.bf16.msra.mxu0 %v996
    %1236 = vmatprep.subr.bf16.mxu0 %v1001
    %1237 = vmatpush1.bf16.msra.mxu0 %v1000
    %1238 = vmatprep.subr.bf16.mxu0 %v1005
    %1239 = vmatpush1.bf16.msra.mxu0 %v1004
    %1240 = vmatprep.subr.bf16.mxu0 %v1009
    %1241 = vmatpush1.bf16.msra.mxu0 %v1008
    %1242 = vmatprep.subr.bf16.mxu0 %v1013
    %1243 = vmatpush1.bf16.msra.mxu0 %v1012
    %1244 = vmatprep.subr.bf16.mxu0 %v1017
    %1245 = vmatpush1.bf16.msra.mxu0 %v1016
    %1246 = vmatprep.subr.bf16.mxu0 %v1021
    %1247 = vmatpush1.bf16.msra.mxu0 %v1020
    %1248 = vmatprep.mubr.bf16.mxu0 %v423
    %1249 = vmatmul.mubr.bf16.gmra.mrb[0].mxu0 %v422
    %v1250 = vpop.f32.mrb[0].mxu0
    %v1251 = vadd.f32 %v559, %v1250
    %v1252 = vpop.f32.mrb[0].mxu0
    %v1253 = vadd.f32 %v563, %v1252
    %v1254 = vpop.f32.mrb[0].mxu0
    %v1255 = vadd.f32 %v559, %v1254
    %v1256 = vpop.f32.mrb[0].mxu0
    %v1257 = vadd.f32 %v563, %v1256
    %1258 = vdwg.mxu0
    %1259 = vmatprep.subr.bf16.mxu0 %v1025
    %1260 = vmatpush1.bf16.msra.mxu0 %v1024
    %1261 = vmatprep.subr.bf16.mxu0 %v1029
    %1262 = vmatpush1.bf16.msra.mxu0 %v1028
    %1263 = vmatprep.subr.bf16.mxu0 %v1033
    %1264 = vmatpush1.bf16.msra.mxu0 %v1032
    %1265 = vmatprep.subr.bf16.mxu0 %v1037
    %1266 = vmatpush1.bf16.msra.mxu0 %v1036
    %1267 = vmatprep.subr.bf16.mxu0 %v1041
    %1268 = vmatpush1.bf16.msra.mxu0 %v1040
    %1269 = vmatprep.subr.bf16.mxu0 %v1045
    %1270 = vmatpush1.bf16.msra.mxu0 %v1044
    %1271 = vmatprep.subr.bf16.mxu0 %v1049
    %1272 = vmatpush1.bf16.msra.mxu0 %v1048
    %1273 = vmatprep.subr.bf16.mxu0 %v1053
    %1274 = vmatpush1.bf16.msra.mxu0 %v1052
    %1275 = vmatprep.subr.bf16.mxu0 %v1057
    %1276 = vmatpush1.bf16.msra.mxu0 %v1056
    %1277 = vmatprep.subr.bf16.mxu0 %v1061
    %1278 = vmatpush1.bf16.msra.mxu0 %v1060
    %1279 = vmatprep.subr.bf16.mxu0 %v1065
    %1280 = vmatpush1.bf16.msra.mxu0 %v1064
    %1281 = vmatprep.subr.bf16.mxu0 %v1069
    %1282 = vmatpush1.bf16.msra.mxu0 %v1068
    %1283 = vmatprep.subr.bf16.mxu0 %v1073
    %1284 = vmatpush1.bf16.msra.mxu0 %v1072
    %1285 = vmatprep.subr.bf16.mxu0 %v1077
    %1286 = vmatpush1.bf16.msra.mxu0 %v1076
    %1287 = vmatprep.subr.bf16.mxu0 %v1081
    %1288 = vmatpush1.bf16.msra.mxu0 %v1080
    %1289 = vmatprep.subr.bf16.mxu0 %v1085
    %1290 = vmatpush1.bf16.msra.mxu0 %v1084
    %1291 = vmatprep.mubr.bf16.mxu0 %v425
    %1292 = vmatmul.mubr.bf16.gmra.mrb[0].mxu0 %v424
    %v1293 = vpop.f32.mrb[0].mxu0
    %v1294 = vadd.f32 %v1251, %v1293
    %v1295 = vpop.f32.mrb[0].mxu0
    %v1296 = vadd.f32 %v1253, %v1295
    %v1297 = vpop.f32.mrb[0].mxu0
    %v1298 = vadd.f32 %v1255, %v1297
    %v1299 = vpop.f32.mrb[0].mxu0
    %v1300 = vadd.f32 %v1257, %v1299
    %1301 = vdwg.mxu0
    %1302 = vmatprep.subr.bf16.mxu0 %v963
    %1303 = vmatpush1.bf16.msra.mxu0 %v962
    %1304 = vmatprep.subr.bf16.mxu0 %v967
    %1305 = vmatpush1.bf16.msra.mxu0 %v966
    %1306 = vmatprep.subr.bf16.mxu0 %v971
    %1307 = vmatpush1.bf16.msra.mxu0 %v970
    %1308 = vmatprep.subr.bf16.mxu0 %v975
    %1309 = vmatpush1.bf16.msra.mxu0 %v974
    %1310 = vmatprep.subr.bf16.mxu0 %v979
    %1311 = vmatpush1.bf16.msra.mxu0 %v978
    %1312 = vmatprep.subr.bf16.mxu0 %v983
    %1313 = vmatpush1.bf16.msra.mxu0 %v982
    %1314 = vmatprep.subr.bf16.mxu0 %v987
    %1315 = vmatpush1.bf16.msra.mxu0 %v986
    %1316 = vmatprep.subr.bf16.mxu0 %v991
    %1317 = vmatpush1.bf16.msra.mxu0 %v990
    %1318 = vmatprep.subr.bf16.mxu0 %v995
    %1319 = vmatpush1.bf16.msra.mxu0 %v994
    %1320 = vmatprep.subr.bf16.mxu0 %v999
    %1321 = vmatpush1.bf16.msra.mxu0 %v998
    %1322 = vmatprep.subr.bf16.mxu0 %v1003
    %1323 = vmatpush1.bf16.msra.mxu0 %v1002
    %1324 = vmatprep.subr.bf16.mxu0 %v1007
    %1325 = vmatpush1.bf16.msra.mxu0 %v1006
    %1326 = vmatprep.subr.bf16.mxu0 %v1011
    %1327 = vmatpush1.bf16.msra.mxu0 %v1010
    %1328 = vmatprep.subr.bf16.mxu0 %v1015
    %1329 = vmatpush1.bf16.msra.mxu0 %v1014
    %1330 = vmatprep.subr.bf16.mxu0 %v1019
    %1331 = vmatpush1.bf16.msra.mxu0 %v1018
    %1332 = vmatprep.subr.bf16.mxu0 %v1023
    %1333 = vmatpush1.bf16.msra.mxu0 %v1022
    %1334 = vmatprep.mubr.bf16.mxu0 %v423
    %1335 = vmatmul.mubr.bf16.gmra.mrb[0].mxu0 %v422
    %v1336 = vpop.f32.mrb[0].mxu0
    %v1337 = vadd.f32 %v567, %v1336
    %v1338 = vpop.f32.mrb[0].mxu0
    %v1339 = vadd.f32 %v571, %v1338
    %v1340 = vpop.f32.mrb[0].mxu0
    %v1341 = vadd.f32 %v567, %v1340
    %v1342 = vpop.f32.mrb[0].mxu0
    %v1343 = vadd.f32 %v571, %v1342
    %1344 = vdwg.mxu0
    %1345 = vmatprep.subr.bf16.mxu0 %v1027
    %1346 = vmatpush1.bf16.msra.mxu0 %v1026
    %1347 = vmatprep.subr.bf16.mxu0 %v1031
    %1348 = vmatpush1.bf16.msra.mxu0 %v1030
    %1349 = vmatprep.subr.bf16.mxu0 %v1035
    %1350 = vmatpush1.bf16.msra.mxu0 %v1034
    %1351 = vmatprep.subr.bf16.mxu0 %v1039
    %1352 = vmatpush1.bf16.msra.mxu0 %v1038
    %1353 = vmatprep.subr.bf16.mxu0 %v1043
    %1354 = vmatpush1.bf16.msra.mxu0 %v1042
    %1355 = vmatprep.subr.bf16.mxu0 %v1047
    %1356 = vmatpush1.bf16.msra.mxu0 %v1046
    %1357 = vmatprep.subr.bf16.mxu0 %v1051
    %1358 = vmatpush1.bf16.msra.mxu0 %v1050
    %1359 = vmatprep.subr.bf16.mxu0 %v1055
    %1360 = vmatpush1.bf16.msra.mxu0 %v1054
    %1361 = vmatprep.subr.bf16.mxu0 %v1059
    %1362 = vmatpush1.bf16.msra.mxu0 %v1058
    %1363 = vmatprep.subr.bf16.mxu0 %v1063
    %1364 = vmatpush1.bf16.msra.mxu0 %v1062
    %1365 = vmatprep.subr.bf16.mxu0 %v1067
    %1366 = vmatpush1.bf16.msra.mxu0 %v1066
    %1367 = vmatprep.subr.bf16.mxu0 %v1071
    %1368 = vmatpush1.bf16.msra.mxu0 %v1070
    %1369 = vmatprep.subr.bf16.mxu0 %v1075
    %1370 = vmatpush1.bf16.msra.mxu0 %v1074
    %1371 = vmatprep.subr.bf16.mxu0 %v1079
    %1372 = vmatpush1.bf16.msra.mxu0 %v1078
    %1373 = vmatprep.subr.bf16.mxu0 %v1083
    %1374 = vmatpush1.bf16.msra.mxu0 %v1082
    %1375 = vmatprep.subr.bf16.mxu0 %v1087
    %1376 = vmatpush1.bf16.msra.mxu0 %v1086
    %1377 = vmatprep.mubr.bf16.mxu0 %v425
    %1378 = vmatmul.mubr.bf16.gmra.mrb[0].mxu0 %v424
    %v1379 = vpop.f32.mrb[0].mxu0
    %v1380 = vadd.f32 %v1337, %v1379
    %v1381 = vpop.f32.mrb[0].mxu0
    %v1382 = vadd.f32 %v1339, %v1381
    %v1383 = vpop.f32.mrb[0].mxu0
    %v1384 = vadd.f32 %v1341, %v1383
    %v1385 = vpop.f32.mrb[0].mxu0
    %v1386 = vadd.f32 %v1343, %v1385
    %1387 = vdwg.mxu0
    %v1388 = vmax.f32 %v1294, 0.0
    %v1389 = vmax.f32 %v1296, 0.0
    %v1390 = vmax.f32 %v1380, 0.0
    %v1391 = vmax.f32 %v1382, 0.0
    %v1392 = vmax.f32 %v1298, 0.0
    %v1393 = vmax.f32 %v1300, 0.0
    %v1394 = vmax.f32 %v1384, 0.0
    %v1395 = vmax.f32 %v1386, 0.0
    %v1396 = vpack.c.bf16 %v1392, %v1388
    %v1397 = vpack.c.bf16 %v1393, %v1389
    %v1398 = vpack.c.bf16 %v1394, %v1390
    %v1399 = vpack.c.bf16 %v1395, %v1391
    %v1400 = vld [vmem:[#allocation7] sm:$0xff]
    %v1401 = vld [vmem:[#allocation7 + $0x8] sm:$0xff]
    %v1402 = vld [vmem:[#allocation7 + $0x10] sm:$0xff]
    %v1403 = vld [vmem:[#allocation7 + $0x18] sm:$0xff]
    %v1404 = vld [vmem:[#allocation7 + $0x20] sm:$0xff]
    %v1405 = vld [vmem:[#allocation7 + $0x28] sm:$0xff]
    %v1406 = vld [vmem:[#allocation7 + $0x30] sm:$0xff]
    %v1407 = vld [vmem:[#allocation7 + $0x38] sm:$0xff]
    %v1408 = vld [vmem:[#allocation7 + $0x40] sm:$0xff]
    %v1409 = vld [vmem:[#allocation7 + $0x48] sm:$0xff]
    %v1410 = vld [vmem:[#allocation7 + $0x50] sm:$0xff]
    %v1411 = vld [vmem:[#allocation7 + $0x58] sm:$0xff]
    %v1412 = vld [vmem:[#allocation7 + $0x60] sm:$0xff]
    %v1413 = vld [vmem:[#allocation7 + $0x68] sm:$0xff]
    %v1414 = vld [vmem:[#allocation7 + $0x70] sm:$0xff]
    %v1415 = vld [vmem:[#allocation7 + $0x78] sm:$0xff]
    %v1416 = vld [vmem:[#allocation7 + $0x80] sm:$0xff]
    %v1417 = vld [vmem:[#allocation7 + $0x88] sm:$0xff]
    %v1418 = vld [vmem:[#allocation7 + $0x90] sm:$0xff]
    %v1419 = vld [vmem:[#allocation7 + $0x98] sm:$0xff]
    %v1420 = vld [vmem:[#allocation7 + $0xa0] sm:$0xff]
    %v1421 = vld [vmem:[#allocation7 + $0xa8] sm:$0xff]
    %v1422 = vld [vmem:[#allocation7 + $0xb0] sm:$0xff]
    %v1423 = vld [vmem:[#allocation7 + $0xb8] sm:$0xff]
    %v1424 = vld [vmem:[#allocation7 + $0xc0] sm:$0xff]
    %v1425 = vld [vmem:[#allocation7 + $0xc8] sm:$0xff]
    %v1426 = vld [vmem:[#allocation7 + $0xd0] sm:$0xff]
    %v1427 = vld [vmem:[#allocation7 + $0xd8] sm:$0xff]
    %v1428 = vld [vmem:[#allocation7 + $0xe0] sm:$0xff]
    %v1429 = vld [vmem:[#allocation7 + $0xe8] sm:$0xff]
    %v1430 = vld [vmem:[#allocation7 + $0xf0] sm:$0xff]
    %v1431 = vld [vmem:[#allocation7 + $0xf8] sm:$0xff]
    %v1432 = vld [vmem:[#allocation7 + $0x100] sm:$0xff]
    %v1433 = vld [vmem:[#allocation7 + $0x108] sm:$0xff]
    %v1434 = vld [vmem:[#allocation7 + $0x110] sm:$0xff]
    %v1435 = vld [vmem:[#allocation7 + $0x118] sm:$0xff]
    %v1436 = vld [vmem:[#allocation7 + $0x120] sm:$0xff]
    %v1437 = vld [vmem:[#allocation7 + $0x128] sm:$0xff]
    %v1438 = vld [vmem:[#allocation7 + $0x130] sm:$0xff]
    %v1439 = vld [vmem:[#allocation7 + $0x138] sm:$0xff]
    %v1440 = vld [vmem:[#allocation7 + $0x140] sm:$0xff]
    %v1441 = vld [vmem:[#allocation7 + $0x148] sm:$0xff]
    %v1442 = vld [vmem:[#allocation7 + $0x150] sm:$0xff]
    %v1443 = vld [vmem:[#allocation7 + $0x158] sm:$0xff]
    %v1444 = vld [vmem:[#allocation7 + $0x160] sm:$0xff]
    %v1445 = vld [vmem:[#allocation7 + $0x168] sm:$0xff]
    %v1446 = vld [vmem:[#allocation7 + $0x170] sm:$0xff]
    %v1447 = vld [vmem:[#allocation7 + $0x178] sm:$0xff]
    %v1448 = vld [vmem:[#allocation7 + $0x180] sm:$0xff]
    %v1449 = vld [vmem:[#allocation7 + $0x188] sm:$0xff]
    %v1450 = vld [vmem:[#allocation7 + $0x190] sm:$0xff]
    %v1451 = vld [vmem:[#allocation7 + $0x198] sm:$0xff]
    %v1452 = vld [vmem:[#allocation7 + $0x1a0] sm:$0xff]
    %v1453 = vld [vmem:[#allocation7 + $0x1a8] sm:$0xff]
    %v1454 = vld [vmem:[#allocation7 + $0x1b0] sm:$0xff]
    %v1455 = vld [vmem:[#allocation7 + $0x1b8] sm:$0xff]
    %v1456 = vld [vmem:[#allocation7 + $0x1c0] sm:$0xff]
    %v1457 = vld [vmem:[#allocation7 + $0x1c8] sm:$0xff]
    %v1458 = vld [vmem:[#allocation7 + $0x1d0] sm:$0xff]
    %v1459 = vld [vmem:[#allocation7 + $0x1d8] sm:$0xff]
    %v1460 = vld [vmem:[#allocation7 + $0x1e0] sm:$0xff]
    %v1461 = vld [vmem:[#allocation7 + $0x1e8] sm:$0xff]
    %v1462 = vld [vmem:[#allocation7 + $0x1f0] sm:$0xff]
    %v1463 = vld [vmem:[#allocation7 + $0x1f8] sm:$0xff]
    %v1464 = vld [vmem:[%s6] sm:$0x3]
    %v1466 = vlaneseq
    %v1467 = vshrl.u32 %v1466, 7
    %v1468 = vsub.s32 0, %v1467
    %v1469 = vrot.slane %v1464, %v1468
    %v1470 = vlaneseq
    %v1471 = vshrl.u32 %v1470, 7
    %v1472 = vsub.s32 1, %v1471
    %v1473 = vrot.slane %v1464, %v1472
    %v1540 = vunpack.c.l.b16 %v1400
    %v1541 = vunpack.c.h.b16 %v1400
    %v1542 = vunpack.c.l.b16 %v1401
    %v1543 = vunpack.c.h.b16 %v1401
    %v1544 = vunpack.c.l.b16 %v1402
    %v1545 = vunpack.c.h.b16 %v1402
    %v1546 = vunpack.c.l.b16 %v1403
    %v1547 = vunpack.c.h.b16 %v1403
    %v1548 = vunpack.c.l.b16 %v1404
    %v1549 = vunpack.c.h.b16 %v1404
    %v1550 = vunpack.c.l.b16 %v1405
    %v1551 = vunpack.c.h.b16 %v1405
    %v1552 = vunpack.c.l.b16 %v1406
    %v1553 = vunpack.c.h.b16 %v1406
    %v1554 = vunpack.c.l.b16 %v1407
    %v1555 = vunpack.c.h.b16 %v1407
    %v1556 = vunpack.c.l.b16 %v1408
    %v1557 = vunpack.c.h.b16 %v1408
    %v1558 = vunpack.c.l.b16 %v1409
    %v1559 = vunpack.c.h.b16 %v1409
    %v1560 = vunpack.c.l.b16 %v1410
    %v1561 = vunpack.c.h.b16 %v1410
    %v1562 = vunpack.c.l.b16 %v1411
    %v1563 = vunpack.c.h.b16 %v1411
    %v1564 = vunpack.c.l.b16 %v1412
    %v1565 = vunpack.c.h.b16 %v1412
    %v1566 = vunpack.c.l.b16 %v1413
    %v1567 = vunpack.c.h.b16 %v1413
    %v1568 = vunpack.c.l.b16 %v1414
    %v1569 = vunpack.c.h.b16 %v1414
    %v1570 = vunpack.c.l.b16 %v1415
    %v1571 = vunpack.c.h.b16 %v1415
    %v1572 = vunpack.c.l.b16 %v1416
    %v1573 = vunpack.c.h.b16 %v1416
    %v1574 = vunpack.c.l.b16 %v1417
    %v1575 = vunpack.c.h.b16 %v1417
    %v1576 = vunpack.c.l.b16 %v1418
    %v1577 = vunpack.c.h.b16 %v1418
    %v1578 = vunpack.c.l.b16 %v1419
    %v1579 = vunpack.c.h.b16 %v1419
    %v1580 = vunpack.c.l.b16 %v1420
    %v1581 = vunpack.c.h.b16 %v1420
    %v1582 = vunpack.c.l.b16 %v1421
    %v1583 = vunpack.c.h.b16 %v1421
    %v1584 = vunpack.c.l.b16 %v1422
    %v1585 = vunpack.c.h.b16 %v1422
    %v1586 = vunpack.c.l.b16 %v1423
    %v1587 = vunpack.c.h.b16 %v1423
    %v1588 = vunpack.c.l.b16 %v1424
    %v1589 = vunpack.c.h.b16 %v1424
    %v1590 = vunpack.c.l.b16 %v1425
    %v1591 = vunpack.c.h.b16 %v1425
    %v1592 = vunpack.c.l.b16 %v1426
    %v1593 = vunpack.c.h.b16 %v1426
    %v1594 = vunpack.c.l.b16 %v1427
    %v1595 = vunpack.c.h.b16 %v1427
    %v1596 = vunpack.c.l.b16 %v1428
    %v1597 = vunpack.c.h.b16 %v1428
    %v1598 = vunpack.c.l.b16 %v1429
    %v1599 = vunpack.c.h.b16 %v1429
    %v1600 = vunpack.c.l.b16 %v1430
    %v1601 = vunpack.c.h.b16 %v1430
    %v1602 = vunpack.c.l.b16 %v1431
    %v1603 = vunpack.c.h.b16 %v1431
    %v1604 = vunpack.c.l.b16 %v1432
    %v1605 = vunpack.c.h.b16 %v1432
    %v1606 = vunpack.c.l.b16 %v1433
    %v1607 = vunpack.c.h.b16 %v1433
    %v1608 = vunpack.c.l.b16 %v1434
    %v1609 = vunpack.c.h.b16 %v1434
    %v1610 = vunpack.c.l.b16 %v1435
    %v1611 = vunpack.c.h.b16 %v1435
    %v1612 = vunpack.c.l.b16 %v1436
    %v1613 = vunpack.c.h.b16 %v1436
    %v1614 = vunpack.c.l.b16 %v1437
    %v1615 = vunpack.c.h.b16 %v1437
    %v1616 = vunpack.c.l.b16 %v1438
    %v1617 = vunpack.c.h.b16 %v1438
    %v1618 = vunpack.c.l.b16 %v1439
    %v1619 = vunpack.c.h.b16 %v1439
    %v1620 = vunpack.c.l.b16 %v1440
    %v1621 = vunpack.c.h.b16 %v1440
    %v1622 = vunpack.c.l.b16 %v1441
    %v1623 = vunpack.c.h.b16 %v1441
    %v1624 = vunpack.c.l.b16 %v1442
    %v1625 = vunpack.c.h.b16 %v1442
    %v1626 = vunpack.c.l.b16 %v1443
    %v1627 = vunpack.c.h.b16 %v1443
    %v1628 = vunpack.c.l.b16 %v1444
    %v1629 = vunpack.c.h.b16 %v1444
    %v1630 = vunpack.c.l.b16 %v1445
    %v1631 = vunpack.c.h.b16 %v1445
    %v1632 = vunpack.c.l.b16 %v1446
    %v1633 = vunpack.c.h.b16 %v1446
    %v1634 = vunpack.c.l.b16 %v1447
    %v1635 = vunpack.c.h.b16 %v1447
    %v1636 = vunpack.c.l.b16 %v1448
    %v1637 = vunpack.c.h.b16 %v1448
    %v1638 = vunpack.c.l.b16 %v1449
    %v1639 = vunpack.c.h.b16 %v1449
    %v1640 = vunpack.c.l.b16 %v1450
    %v1641 = vunpack.c.h.b16 %v1450
    %v1642 = vunpack.c.l.b16 %v1451
    %v1643 = vunpack.c.h.b16 %v1451
    %v1644 = vunpack.c.l.b16 %v1452
    %v1645 = vunpack.c.h.b16 %v1452
    %v1646 = vunpack.c.l.b16 %v1453
    %v1647 = vunpack.c.h.b16 %v1453
    %v1648 = vunpack.c.l.b16 %v1454
    %v1649 = vunpack.c.h.b16 %v1454
    %v1650 = vunpack.c.l.b16 %v1455
    %v1651 = vunpack.c.h.b16 %v1455
    %v1652 = vunpack.c.l.b16 %v1456
    %v1653 = vunpack.c.h.b16 %v1456
    %v1654 = vunpack.c.l.b16 %v1457
    %v1655 = vunpack.c.h.b16 %v1457
    %v1656 = vunpack.c.l.b16 %v1458
    %v1657 = vunpack.c.h.b16 %v1458
    %v1658 = vunpack.c.l.b16 %v1459
    %v1659 = vunpack.c.h.b16 %v1459
    %v1660 = vunpack.c.l.b16 %v1460
    %v1661 = vunpack.c.h.b16 %v1460
    %v1662 = vunpack.c.l.b16 %v1461
    %v1663 = vunpack.c.h.b16 %v1461
    %v1664 = vunpack.c.l.b16 %v1462
    %v1665 = vunpack.c.h.b16 %v1462
    %v1666 = vunpack.c.l.b16 %v1463
    %v1667 = vunpack.c.h.b16 %v1463
    %v1668 = vpack.c.b16 %v1542, %v1540
    %v1669 = vpack.c.b16 %v1543, %v1541
    %v1670 = vpack.c.b16 %v1546, %v1544
    %v1671 = vpack.c.b16 %v1547, %v1545
    %v1672 = vpack.c.b16 %v1550, %v1548
    %v1673 = vpack.c.b16 %v1551, %v1549
    %v1674 = vpack.c.b16 %v1554, %v1552
    %v1675 = vpack.c.b16 %v1555, %v1553
    %v1676 = vpack.c.b16 %v1558, %v1556
    %v1677 = vpack.c.b16 %v1559, %v1557
    %v1678 = vpack.c.b16 %v1562, %v1560
    %v1679 = vpack.c.b16 %v1563, %v1561
    %v1680 = vpack.c.b16 %v1566, %v1564
    %v1681 = vpack.c.b16 %v1567, %v1565
    %v1682 = vpack.c.b16 %v1570, %v1568
    %v1683 = vpack.c.b16 %v1571, %v1569
    %v1684 = vpack.c.b16 %v1574, %v1572
    %v1685 = vpack.c.b16 %v1575, %v1573
    %v1686 = vpack.c.b16 %v1578, %v1576
    %v1687 = vpack.c.b16 %v1579, %v1577
    %v1688 = vpack.c.b16 %v1582, %v1580
    %v1689 = vpack.c.b16 %v1583, %v1581
    %v1690 = vpack.c.b16 %v1586, %v1584
    %v1691 = vpack.c.b16 %v1587, %v1585
    %v1692 = vpack.c.b16 %v1590, %v1588
    %v1693 = vpack.c.b16 %v1591, %v1589
    %v1694 = vpack.c.b16 %v1594, %v1592
    %v1695 = vpack.c.b16 %v1595, %v1593
    %v1696 = vpack.c.b16 %v1598, %v1596
    %v1697 = vpack.c.b16 %v1599, %v1597
    %v1698 = vpack.c.b16 %v1602, %v1600
    %v1699 = vpack.c.b16 %v1603, %v1601
    %v1700 = vpack.c.b16 %v1606, %v1604
    %v1701 = vpack.c.b16 %v1607, %v1605
    %v1702 = vpack.c.b16 %v1610, %v1608
    %v1703 = vpack.c.b16 %v1611, %v1609
    %v1704 = vpack.c.b16 %v1614, %v1612
    %v1705 = vpack.c.b16 %v1615, %v1613
    %v1706 = vpack.c.b16 %v1618, %v1616
    %v1707 = vpack.c.b16 %v1619, %v1617
    %v1708 = vpack.c.b16 %v1622, %v1620
    %v1709 = vpack.c.b16 %v1623, %v1621
    %v1710 = vpack.c.b16 %v1626, %v1624
    %v1711 = vpack.c.b16 %v1627, %v1625
    %v1712 = vpack.c.b16 %v1630, %v1628
    %v1713 = vpack.c.b16 %v1631, %v1629
    %v1714 = vpack.c.b16 %v1634, %v1632
    %v1715 = vpack.c.b16 %v1635, %v1633
    %v1716 = vpack.c.b16 %v1638, %v1636
    %v1717 = vpack.c.b16 %v1639, %v1637
    %v1718 = vpack.c.b16 %v1642, %v1640
    %v1719 = vpack.c.b16 %v1643, %v1641
    %v1720 = vpack.c.b16 %v1646, %v1644
    %v1721 = vpack.c.b16 %v1647, %v1645
    %v1722 = vpack.c.b16 %v1650, %v1648
    %v1723 = vpack.c.b16 %v1651, %v1649
    %v1724 = vpack.c.b16 %v1654, %v1652
    %v1725 = vpack.c.b16 %v1655, %v1653
    %v1726 = vpack.c.b16 %v1658, %v1656
    %v1727 = vpack.c.b16 %v1659, %v1657
    %v1728 = vpack.c.b16 %v1662, %v1660
    %v1729 = vpack.c.b16 %v1663, %v1661
    %v1730 = vpack.c.b16 %v1666, %v1664
    %v1731 = vpack.c.b16 %v1667, %v1665
    %1796 = vmatprep.subr.bf16.mxu0 %v1669
    %1797 = vmatpush1.bf16.msra.mxu0 %v1668
    %1798 = vmatprep.subr.bf16.mxu0 %v1671
    %1799 = vmatpush1.bf16.msra.mxu0 %v1670
    %1800 = vmatprep.subr.bf16.mxu0 %v1673
    %1801 = vmatpush1.bf16.msra.mxu0 %v1672
    %1802 = vmatprep.subr.bf16.mxu0 %v1675
    %1803 = vmatpush1.bf16.msra.mxu0 %v1674
    %1804 = vmatprep.subr.bf16.mxu0 %v1677
    %1805 = vmatpush1.bf16.msra.mxu0 %v1676
    %1806 = vmatprep.subr.bf16.mxu0 %v1679
    %1807 = vmatpush1.bf16.msra.mxu0 %v1678
    %1808 = vmatprep.subr.bf16.mxu0 %v1681
    %1809 = vmatpush1.bf16.msra.mxu0 %v1680
    %1810 = vmatprep.subr.bf16.mxu0 %v1683
    %1811 = vmatpush1.bf16.msra.mxu0 %v1682
    %1812 = vmatprep.subr.bf16.mxu0 %v1685
    %1813 = vmatpush1.bf16.msra.mxu0 %v1684
    %1814 = vmatprep.subr.bf16.mxu0 %v1687
    %1815 = vmatpush1.bf16.msra.mxu0 %v1686
    %1816 = vmatprep.subr.bf16.mxu0 %v1689
    %1817 = vmatpush1.bf16.msra.mxu0 %v1688
    %1818 = vmatprep.subr.bf16.mxu0 %v1691
    %1819 = vmatpush1.bf16.msra.mxu0 %v1690
    %1820 = vmatprep.subr.bf16.mxu0 %v1693
    %1821 = vmatpush1.bf16.msra.mxu0 %v1692
    %1822 = vmatprep.subr.bf16.mxu0 %v1695
    %1823 = vmatpush1.bf16.msra.mxu0 %v1694
    %1824 = vmatprep.subr.bf16.mxu0 %v1697
    %1825 = vmatpush1.bf16.msra.mxu0 %v1696
    %1826 = vmatprep.subr.bf16.mxu0 %v1699
    %1827 = vmatpush1.bf16.msra.mxu0 %v1698
    %1828 = vmatprep.mubr.bf16.mxu0 %v1397
    %1829 = vmatmul.mubr.bf16.gmra.mrb[0].mxu0 %v1396
    %v1830 = vpop.f32.mrb[0].mxu0
    %v1831 = vadd.f32 %v1469, %v1830
    %v1832 = vpop.f32.mrb[0].mxu0
    %v1833 = vadd.f32 %v1473, %v1832
    %v1834 = vpop.f32.mrb[0].mxu0
    %v1835 = vadd.f32 %v1469, %v1834
    %v1836 = vpop.f32.mrb[0].mxu0
    %v1837 = vadd.f32 %v1473, %v1836
    %1838 = vdwg.mxu0
    %1839 = vmatprep.subr.bf16.mxu0 %v1701
    %1840 = vmatpush1.bf16.msra.mxu0 %v1700
    %1841 = vmatprep.subr.bf16.mxu0 %v1703
    %1842 = vmatpush1.bf16.msra.mxu0 %v1702
    %1843 = vmatprep.subr.bf16.mxu0 %v1705
    %1844 = vmatpush1.bf16.msra.mxu0 %v1704
    %1845 = vmatprep.subr.bf16.mxu0 %v1707
    %1846 = vmatpush1.bf16.msra.mxu0 %v1706
    %1847 = vmatprep.subr.bf16.mxu0 %v1709
    %1848 = vmatpush1.bf16.msra.mxu0 %v1708
    %1849 = vmatprep.subr.bf16.mxu0 %v1711
    %1850 = vmatpush1.bf16.msra.mxu0 %v1710
    %1851 = vmatprep.subr.bf16.mxu0 %v1713
    %1852 = vmatpush1.bf16.msra.mxu0 %v1712
    %1853 = vmatprep.subr.bf16.mxu0 %v1715
    %1854 = vmatpush1.bf16.msra.mxu0 %v1714
    %1855 = vmatprep.subr.bf16.mxu0 %v1717
    %1856 = vmatpush1.bf16.msra.mxu0 %v1716
    %1857 = vmatprep.subr.bf16.mxu0 %v1719
    %1858 = vmatpush1.bf16.msra.mxu0 %v1718
    %1859 = vmatprep.subr.bf16.mxu0 %v1721
    %1860 = vmatpush1.bf16.msra.mxu0 %v1720
    %1861 = vmatprep.subr.bf16.mxu0 %v1723
    %1862 = vmatpush1.bf16.msra.mxu0 %v1722
    %1863 = vmatprep.subr.bf16.mxu0 %v1725
    %1864 = vmatpush1.bf16.msra.mxu0 %v1724
    %1865 = vmatprep.subr.bf16.mxu0 %v1727
    %1866 = vmatpush1.bf16.msra.mxu0 %v1726
    %1867 = vmatprep.subr.bf16.mxu0 %v1729
    %1868 = vmatpush1.bf16.msra.mxu0 %v1728
    %1869 = vmatprep.subr.bf16.mxu0 %v1731
    %1870 = vmatpush1.bf16.msra.mxu0 %v1730
    %1871 = vmatprep.mubr.bf16.mxu0 %v1399
    %1872 = vmatmul.mubr.bf16.gmra.mrb[0].mxu0 %v1398
    %v1873 = vpop.f32.mrb[0].mxu0
    %v1874 = vadd.f32 %v1831, %v1873
    %v1875 = vpop.f32.mrb[0].mxu0
    %v1876 = vadd.f32 %v1833, %v1875
    %v1877 = vpop.f32.mrb[0].mxu0
    %v1878 = vadd.f32 %v1835, %v1877
    %v1879 = vpop.f32.mrb[0].mxu0
    %v1880 = vadd.f32 %v1837, %v1879
    %1881 = vdwg.mxu0
    %v1882 = vmax.f32 %v1874, 0.0
    %v1883 = vmax.f32 %v1876, 0.0
    %v1884 = vmax.f32 %v1878, 0.0
    %v1885 = vmax.f32 %v1880, 0.0
    %v1886 = vpack.c.bf16 %v1884, %v1882
    %v1887 = vpack.c.bf16 %v1885, %v1883
    %v1888 = vld [vmem:[#allocation8] sm:$0xf]
    %v1889 = vld [vmem:[#allocation8 + $0x4] sm:$0xf]
    %v1890 = vld [vmem:[#allocation8 + $0x8] sm:$0xf]
    %v1891 = vld [vmem:[#allocation8 + $0xc] sm:$0xf]
    %v1892 = vld [vmem:[#allocation8 + $0x10] sm:$0xf]
    %v1893 = vld [vmem:[#allocation8 + $0x14] sm:$0xf]
    %v1894 = vld [vmem:[#allocation8 + $0x18] sm:$0xf]
    %v1895 = vld [vmem:[#allocation8 + $0x1c] sm:$0xf]
    %v1896 = vld [vmem:[#allocation8 + $0x20] sm:$0xf]
    %v1897 = vld [vmem:[#allocation8 + $0x24] sm:$0xf]
    %v1898 = vld [vmem:[#allocation8 + $0x28] sm:$0xf]
    %v1899 = vld [vmem:[#allocation8 + $0x2c] sm:$0xf]
    %v1900 = vld [vmem:[#allocation8 + $0x30] sm:$0xf]
    %v1901 = vld [vmem:[#allocation8 + $0x34] sm:$0xf]
    %v1902 = vld [vmem:[#allocation8 + $0x38] sm:$0xf]
    %v1903 = vld [vmem:[#allocation8 + $0x3c] sm:$0xf]
    %v1904 = vld [vmem:[#allocation8 + $0x40] sm:$0xf]
    %v1905 = vld [vmem:[#allocation8 + $0x44] sm:$0xf]
    %v1906 = vld [vmem:[#allocation8 + $0x48] sm:$0xf]
    %v1907 = vld [vmem:[#allocation8 + $0x4c] sm:$0xf]
    %v1908 = vld [vmem:[#allocation8 + $0x50] sm:$0xf]
    %v1909 = vld [vmem:[#allocation8 + $0x54] sm:$0xf]
    %v1910 = vld [vmem:[#allocation8 + $0x58] sm:$0xf]
    %v1911 = vld [vmem:[#allocation8 + $0x5c] sm:$0xf]
    %v1912 = vld [vmem:[#allocation8 + $0x60] sm:$0xf]
    %v1913 = vld [vmem:[#allocation8 + $0x64] sm:$0xf]
    %v1914 = vld [vmem:[#allocation8 + $0x68] sm:$0xf]
    %v1915 = vld [vmem:[#allocation8 + $0x6c] sm:$0xf]
    %v1916 = vld [vmem:[#allocation8 + $0x70] sm:$0xf]
    %v1917 = vld [vmem:[#allocation8 + $0x74] sm:$0xf]
    %v1918 = vld [vmem:[#allocation8 + $0x78] sm:$0xf]
    %v1919 = vld [vmem:[#allocation8 + $0x7c] sm:$0xf]
    %v1920 = vld [vmem:[%s8] sm:$0x1]
    %v1922 = vlaneseq
    %v1923 = vshrl.u32 %v1922, 7
    %v1924 = vsub.s32 0, %v1923
    %v1925 = vrot.slane %v1920, %v1924
    %v1959 = vunpack.c.l.b16 %v1888
    %v1960 = vunpack.c.l.b16 %v1889
    %v1961 = vunpack.c.l.b16 %v1890
    %v1962 = vunpack.c.l.b16 %v1891
    %v1963 = vunpack.c.l.b16 %v1892
    %v1964 = vunpack.c.l.b16 %v1893
    %v1965 = vunpack.c.l.b16 %v1894
    %v1966 = vunpack.c.l.b16 %v1895
    %v1967 = vunpack.c.l.b16 %v1896
    %v1968 = vunpack.c.l.b16 %v1897
    %v1969 = vunpack.c.l.b16 %v1898
    %v1970 = vunpack.c.l.b16 %v1899
    %v1971 = vunpack.c.l.b16 %v1900
    %v1972 = vunpack.c.l.b16 %v1901
    %v1973 = vunpack.c.l.b16 %v1902
    %v1974 = vunpack.c.l.b16 %v1903
    %v1975 = vunpack.c.l.b16 %v1904
    %v1976 = vunpack.c.l.b16 %v1905
    %v1977 = vunpack.c.l.b16 %v1906
    %v1978 = vunpack.c.l.b16 %v1907
    %v1979 = vunpack.c.l.b16 %v1908
    %v1980 = vunpack.c.l.b16 %v1909
    %v1981 = vunpack.c.l.b16 %v1910
    %v1982 = vunpack.c.l.b16 %v1911
    %v1983 = vunpack.c.l.b16 %v1912
    %v1984 = vunpack.c.l.b16 %v1913
    %v1985 = vunpack.c.l.b16 %v1914
    %v1986 = vunpack.c.l.b16 %v1915
    %v1987 = vunpack.c.l.b16 %v1916
    %v1988 = vunpack.c.l.b16 %v1917
    %v1989 = vunpack.c.l.b16 %v1918
    %v1990 = vunpack.c.l.b16 %v1919
    %v1991 = vpack.c.b16 %v1960, %v1959
    %v1992 = vpack.c.b16 %v1962, %v1961
    %v1993 = vpack.c.b16 %v1964, %v1963
    %v1994 = vpack.c.b16 %v1966, %v1965
    %v1995 = vpack.c.b16 %v1968, %v1967
    %v1996 = vpack.c.b16 %v1970, %v1969
    %v1997 = vpack.c.b16 %v1972, %v1971
    %v1998 = vpack.c.b16 %v1974, %v1973
    %v1999 = vpack.c.b16 %v1976, %v1975
    %v2000 = vpack.c.b16 %v1978, %v1977
    %v2001 = vpack.c.b16 %v1980, %v1979
    %v2002 = vpack.c.b16 %v1982, %v1981
    %v2003 = vpack.c.b16 %v1984, %v1983
    %v2004 = vpack.c.b16 %v1986, %v1985
    %v2005 = vpack.c.b16 %v1988, %v1987
    %v2006 = vpack.c.b16 %v1990, %v1989
    %2023 = vmatprep.subr.bf16.mxu0 0
    %2024 = vmatpush1.bf16.msra.mxu0 %v1991
    %2025 = vmatprep.subr.bf16.mxu0 0
    %2026 = vmatpush1.bf16.msra.mxu0 %v1992
    %2027 = vmatprep.subr.bf16.mxu0 0
    %2028 = vmatpush1.bf16.msra.mxu0 %v1993
    %2029 = vmatprep.subr.bf16.mxu0 0
    %2030 = vmatpush1.bf16.msra.mxu0 %v1994
    %2031 = vmatprep.subr.bf16.mxu0 0
    %2032 = vmatpush1.bf16.msra.mxu0 %v1995
    %2033 = vmatprep.subr.bf16.mxu0 0
    %2034 = vmatpush1.bf16.msra.mxu0 %v1996
    %2035 = vmatprep.subr.bf16.mxu0 0
    %2036 = vmatpush1.bf16.msra.mxu0 %v1997
    %2037 = vmatprep.subr.bf16.mxu0 0
    %2038 = vmatpush1.bf16.msra.mxu0 %v1998
    %2039 = vmatprep.subr.bf16.mxu0 0
    %2040 = vmatpush1.bf16.msra.mxu0 %v1999
    %2041 = vmatprep.subr.bf16.mxu0 0
    %2042 = vmatpush1.bf16.msra.mxu0 %v2000
    %2043 = vmatprep.subr.bf16.mxu0 0
    %2044 = vmatpush1.bf16.msra.mxu0 %v2001
    %2045 = vmatprep.subr.bf16.mxu0 0
    %2046 = vmatpush1.bf16.msra.mxu0 %v2002
    %2047 = vmatprep.subr.bf16.mxu0 0
    %2048 = vmatpush1.bf16.msra.mxu0 %v2003
    %2049 = vmatprep.subr.bf16.mxu0 0
    %2050 = vmatpush1.bf16.msra.mxu0 %v2004
    %2051 = vmatprep.subr.bf16.mxu0 0
    %2052 = vmatpush1.bf16.msra.mxu0 %v2005
    %2053 = vmatprep.subr.bf16.mxu0 0
    %2054 = vmatpush1.bf16.msra.mxu0 %v2006
    %2055 = vmatprep.mubr.bf16.mxu0 %v1887
    %2056 = vmatmul.mubr.bf16.gmra.mrb[0].mxu0 %v1886
    %v2057 = vpop.f32.mrb[0].mxu0
    %v2058 = vadd.f32 %v1925, %v2057
    %v2059 = vpop.f32.mrb[0].mxu0
    %v2060 = vpop.f32.mrb[0].mxu0
    %v2061 = vadd.f32 %v1925, %v2060
    %v2062 = vpop.f32.mrb[0].mxu0
    %2063 = vdwg.mxu0
    %v2064 = vmax.f32 %v2058, 0.0
    %v2065 = vmax.f32 %v2061, 0.0
    %v2066 = vpack.c.bf16 %v2065, %v2064
    %v2067 = vld [vmem:[#allocation10] sm:$0xf]
    %v2068 = vld [vmem:[#allocation10 + $0x4] sm:$0xf]
    %v2069 = vld [vmem:[#allocation10 + $0x8] sm:$0xf]
    %v2070 = vld [vmem:[#allocation10 + $0xc] sm:$0xf]
    %v2071 = vld [vmem:[#allocation10 + $0x10] sm:$0xf]
    %v2072 = vld [vmem:[#allocation10 + $0x14] sm:$0xf]
    %v2073 = vld [vmem:[#allocation10 + $0x18] sm:$0xf]
    %v2074 = vld [vmem:[#allocation10 + $0x1c] sm:$0xf]
    %v2075 = vld [vmem:[#allocation10 + $0x20] sm:$0xf]
    %v2076 = vld [vmem:[#allocation10 + $0x24] sm:$0xf]
    %v2077 = vld [vmem:[#allocation10 + $0x28] sm:$0xf]
    %v2078 = vld [vmem:[#allocation10 + $0x2c] sm:$0xf]
    %v2079 = vld [vmem:[#allocation10 + $0x30] sm:$0xf]
    %v2080 = vld [vmem:[#allocation10 + $0x34] sm:$0xf]
    %v2081 = vld [vmem:[#allocation10 + $0x38] sm:$0xf]
    %v2082 = vld [vmem:[#allocation10 + $0x3c] sm:$0xf]
    %v2083 = vld [vmem:[%s10] sm:$0x1]
    %v2085 = vlaneseq
    %v2086 = vshrl.u32 %v2085, 7
    %v2087 = vsub.s32 0, %v2086
    %v2088 = vrot.slane %v2083, %v2087
    %v2106 = vunpack.c.l.b16 %v2067
    %v2107 = vunpack.c.l.b16 %v2068
    %v2108 = vunpack.c.l.b16 %v2069
    %v2109 = vunpack.c.l.b16 %v2070
    %v2110 = vunpack.c.l.b16 %v2071
    %v2111 = vunpack.c.l.b16 %v2072
    %v2112 = vunpack.c.l.b16 %v2073
    %v2113 = vunpack.c.l.b16 %v2074
    %v2114 = vunpack.c.l.b16 %v2075
    %v2115 = vunpack.c.l.b16 %v2076
    %v2116 = vunpack.c.l.b16 %v2077
    %v2117 = vunpack.c.l.b16 %v2078
    %v2118 = vunpack.c.l.b16 %v2079
    %v2119 = vunpack.c.l.b16 %v2080
    %v2120 = vunpack.c.l.b16 %v2081
    %v2121 = vunpack.c.l.b16 %v2082
    %v2122 = vpack.c.b16 %v2107, %v2106
    %v2123 = vpack.c.b16 %v2109, %v2108
    %v2124 = vpack.c.b16 %v2111, %v2110
    %v2125 = vpack.c.b16 %v2113, %v2112
    %v2126 = vpack.c.b16 %v2115, %v2114
    %v2127 = vpack.c.b16 %v2117, %v2116
    %v2128 = vpack.c.b16 %v2119, %v2118
    %v2129 = vpack.c.b16 %v2121, %v2120
    %2138 = vmatprep.subr.bf16.mxu0 0
    %2139 = vmatpush1.bf16.msra.mxu0 %v2122
    %2140 = vmatprep.subr.bf16.mxu0 0
    %2141 = vmatpush1.bf16.msra.mxu0 %v2123
    %2142 = vmatprep.subr.bf16.mxu0 0
    %2143 = vmatpush1.bf16.msra.mxu0 %v2124
    %2144 = vmatprep.subr.bf16.mxu0 0
    %2145 = vmatpush1.bf16.msra.mxu0 %v2125
    %2146 = vmatprep.subr.bf16.mxu0 0
    %2147 = vmatpush1.bf16.msra.mxu0 %v2126
    %2148 = vmatprep.subr.bf16.mxu0 0
    %2149 = vmatpush1.bf16.msra.mxu0 %v2127
    %2150 = vmatprep.subr.bf16.mxu0 0
    %2151 = vmatpush1.bf16.msra.mxu0 %v2128
    %2152 = vmatprep.subr.bf16.mxu0 0
    %2153 = vmatpush1.bf16.msra.mxu0 %v2129
    %2154 = vmatprep.subr.bf16.mxu0 0
    %2155 = vmatpush1.bf16.msra.mxu0 0
    %2156 = vmatprep.subr.bf16.mxu0 0
    %2157 = vmatpush1.bf16.msra.mxu0 0
    %2158 = vmatprep.subr.bf16.mxu0 0
    %2159 = vmatpush1.bf16.msra.mxu0 0
    %2160 = vmatprep.subr.bf16.mxu0 0
    %2161 = vmatpush1.bf16.msra.mxu0 0
    %2162 = vmatprep.subr.bf16.mxu0 0
    %2163 = vmatpush1.bf16.msra.mxu0 0
    %2164 = vmatprep.subr.bf16.mxu0 0
    %2165 = vmatpush1.bf16.msra.mxu0 0
    %2166 = vmatprep.subr.bf16.mxu0 0
    %2167 = vmatpush1.bf16.msra.mxu0 0
    %2168 = vmatprep.subr.bf16.mxu0 0
    %2169 = vmatpush1.bf16.msra.mxu0 0
    %2170 = vmatprep.mubr.bf16.mxu0 0
    %2171 = vmatmul.mubr.bf16.gmra.mrb[0].mxu0 %v2066
    %v2172 = vpop.f32.mrb[0].mxu0
    %v2173 = vadd.f32 %v2088, %v2172
    %v2174 = vpop.f32.mrb[0].mxu0
    %v2175 = vpop.f32.mrb[0].mxu0
    %v2176 = vadd.f32 %v2088, %v2175
    %v2177 = vpop.f32.mrb[0].mxu0
    %2178 = vdwg.mxu0
    %v2179 = vtanh.pop %v2173
    %v2180 = vtanh.pop %v2176
    %v2181 = vmul.f32 %v2179, 20.0
    %v2182 = vmul.f32 %v2180, 20.0
    %2183 = vst [vmem:[%s11] sm:$0xff] %v2181
    %2184 = vst [vmem:[%s11 + $0x8] sm:$0xff] %v2182
    // Predicated region
    $region66: #{actor_forward.1} parent=1 // pred_check
      _
    $region67: #{actor_forward.1} parent=1 // pred_check_branch
      %2186 = sbr.rel (0) target = $region69
    $region68: #{actor_forward.1} parent=1 // pred_region
      _
    $region69: #{actor_forward.1} parent=1 // pred_fallthru
      _
    // Predicated region
    $region70: #{actor_forward.1} parent=1 // pred_check
      _
    $region71: #{actor_forward.1} parent=1 // pred_check_branch
      %2188 = sbr.rel (0) target = $region73
    $region72: #{actor_forward.1} parent=1 // pred_region
      _
    $region73: #{actor_forward.1} parent=1 // pred_fallthru
      _
    %2189 = vsyncpa [#allocation4], 1
    %2190 = vsyncpa [#allocation6], 1
    %2191 = vsyncpa [#allocation9], 1

</llo_original>
